<compile_context>
chip_gen: v7x
topology: tpu7x:2x2x1
jax: 0.10.0
libtpu: 0.0.40
codegen_flags: <defaults>
</compile_context>

<pallas_src>
import functools

import jax
import jax.numpy as jnp
from jax.experimental import pallas as pl
from jax.experimental.pallas import tpu as pltpu

IN_FEATURES = 2048   # resnet50 fc in_features
HIDDEN      = 100
HIDDEN_PAD  = 128    # lane-dense padded hidden width
N_C         = 7
N_PHASE     = 10
HEAD_PAD    = 128    # lane-dense width for the concatenated c|phase head

CIN, KH, KW, PAD, STRIDE = 3, 3, 3, 1, 1
K_RAW = CIN * KH * KW            # 27
K_PAD = 32                       # lane-friendlier contraction width


def _pick_tile(total, preferred):
    """Largest divisor of `total` <= preferred that is sublane-aligned.

    Never silently degrades to tiny tiles: if no aligned divisor exists it
    falls back to the full dimension (one block), which is always layout-legal.
    """
    if total <= preferred:
        return total
    for cand in range(preferred, 7, -1):
        if total % cand == 0 and cand % 8 == 0:
            return cand
    return total


# ---------------------------------------------------------------------------
# im2col (XLA glue).  Patch index = (ki*KW + kj)*Cin + c, padded to K_PAD,
# bf16 stream.  (See TODO above re: in-kernel im2col.)
# ---------------------------------------------------------------------------
def _im2col(x_nhwc):
    B, H, W, Cin = x_nhwc.shape
    xp = jnp.pad(x_nhwc, ((0, 0), (PAD, PAD), (PAD, PAD), (0, 0)))
    Ho = (H + 2 * PAD - KH) // STRIDE + 1
    Wo = (W + 2 * PAD - KW) // STRIDE + 1
    cols = []
    for i in range(KH):
        for j in range(KW):
            cols.append(xp[:, i:i + Ho * STRIDE:STRIDE, j:j + Wo * STRIDE:STRIDE, :])
    patches = jnp.stack(cols, axis=3).reshape(B, Ho * Wo, K_RAW)
    # Pad K 27 -> 32: denser DMA rows; the zero columns are inert in the matmul.
    patches = jnp.pad(patches, ((0, 0), (0, 0), (0, K_PAD - K_RAW)))
    return patches


# ---------------------------------------------------------------------------
# Kernel 1: fused conv(as matmul) + bias + ReLU + global-average-pool.
#   grid = (B, Cout//tn, HW//t_hw); HW axis last / "arbitrary"; the (1, tn)
#   output block is resident across it and acts as the pooling accumulator.
#   The (B*HW, 2048) feature map never touches HBM.
# ---------------------------------------------------------------------------
def _conv_gap_kernel(p_ref, w_ref, b_ref, o_ref, *, inv_hw):
    t = pl.program_id(2)

    @pl.when(t == 0)
    def _():
        o_ref[...] = jnp.zeros_like(o_ref)

    # (t_hw, K) bf16 @ (K, tn) bf16 -> (t_hw, tn) f32 on the MXU.
    y = jnp.dot(p_ref[...], w_ref[...], preferred_element_type=jnp.float32)
    y = jnp.maximum(y + b_ref[...], 0.0)
    # Pooling reduction on the (idle) MXU instead of a cross-sublane XLU sum.
    ones_row = jnp.ones((1, y.shape[0]), dtype=jnp.float32)
    o_ref[...] += jnp.dot(ones_row, y, preferred_element_type=jnp.float32)

    @pl.when(t == pl.num_programs(2) - 1)
    def _():
        o_ref[...] *= inv_hw                       # pooled sum -> mean


def conv_gap_pallas(patches, w_mat, b_row, *, tn=512, t_hw=512):
    """patches: (B, HW, K_PAD) bf16, w_mat: (K_PAD, Cout) bf16, b_row: (1, Cout) f32."""
    B, HW, K = patches.shape
    Cout = w_mat.shape[1]
    tn = _pick_tile(Cout, tn)
    t_hw = _pick_tile(HW, t_hw)
    grid = (B, Cout // tn, HW // t_hw)

    feats = pl.pallas_call(
        functools.partial(_conv_gap_kernel, inv_hw=1.0 / float(HW)),
        out_shape=jax.ShapeDtypeStruct((B, 1, Cout), jnp.float32),
        grid=grid,
        in_specs=[
            pl.BlockSpec((None, t_hw, K), lambda b, j, t: (b, t, 0)),
            pl.BlockSpec((K, tn),         lambda b, j, t: (0, j)),
            pl.BlockSpec((1, tn),         lambda b, j, t: (0, j)),
        ],
        out_specs=pl.BlockSpec((None, 1, tn), lambda b, j, t: (b, 0, j)),
        compiler_params=pltpu.CompilerParams(
            dimension_semantics=("parallel", "parallel", "arbitrary")),
    )(patches, w_mat, b_row)
    return feats.reshape(B, Cout)


# ---------------------------------------------------------------------------
# Kernel 2: fused heads  fc(2048->100) -> concat[c(100->7) | phase(100->10)]
# HIDDEN padded to 128 (lane-dense h), output padded to 128 lanes (lane-dense
# store), batch-tiled grid ("parallel") so it pipelines / uses both v7x TCs.
# ---------------------------------------------------------------------------
def _heads_kernel(f_ref, wfc_ref, bfc_ref, wh_ref, bh_ref, o_ref):
    f = f_ref[...].astype(jnp.bfloat16)            # bf16 x bf16 fc matmul
    h = jnp.dot(f, wfc_ref[...],
                preferred_element_type=jnp.float32) + bfc_ref[...]
    o_ref[...] = jnp.dot(h, wh_ref[...],
                         preferred_element_type=jnp.float32) + bh_ref[...]


def heads_pallas(feats, packed, *, tb=256):
    B = feats.shape[0]
    tb = _pick_tile(B, tb)
    out = pl.pallas_call(
        _heads_kernel,
        out_shape=jax.ShapeDtypeStruct((B, HEAD_PAD), jnp.float32),
        grid=(B // tb,),
        in_specs=[
            pl.BlockSpec((tb, IN_FEATURES),         lambda i: (i, 0)),
            pl.BlockSpec((IN_FEATURES, HIDDEN_PAD), lambda i: (0, 0)),
            pl.BlockSpec((1, HIDDEN_PAD),           lambda i: (0, 0)),
            pl.BlockSpec((HIDDEN_PAD, HEAD_PAD),    lambda i: (0, 0)),
            pl.BlockSpec((1, HEAD_PAD),             lambda i: (0, 0)),
        ],
        out_specs=pl.BlockSpec((tb, HEAD_PAD), lambda i: (i, 0)),
        compiler_params=pltpu.CompilerParams(
            dimension_semantics=("parallel",)),
    )(feats, packed["w_fc_t"], packed["b_fc_row"],
      packed["w_heads"], packed["b_heads"])
    return out[:, :N_C], out[:, N_C:N_C + N_PHASE]


# ---------------------------------------------------------------------------
# Parameter init (PyTorch-style U(-1/sqrt(fan_in), 1/sqrt(fan_in))) and a
# one-time packing step (transpose / pad / concat / cast done ONCE).
# ---------------------------------------------------------------------------
def _linear_init(key, out_f, in_f):
    kw_, kb_ = jax.random.split(key)
    bound = 1.0 / float(in_f) ** 0.5
    w = jax.random.uniform(kw_, (out_f, in_f), jnp.float32, -bound, bound)
    b = jax.random.uniform(kb_, (out_f,), jnp.float32, -bound, bound)
    return w, b


def init_params(key):
    k_conv, k_fc, k_c, k_p = jax.random.split(key, 4)
    bound = 1.0 / float(CIN * KH * KW) ** 0.5
    kcw, kcb = jax.random.split(k_conv)
    params = {
        "w_conv": jax.random.uniform(kcw, (IN_FEATURES, CIN, KH, KW),
                                     jnp.float32, -bound, bound),
        "b_conv": jax.random.uniform(kcb, (IN_FEATURES,), jnp.float32,
                                     -bound, bound),
    }
    params["w_fc"], params["b_fc"] = _linear_init(k_fc, HIDDEN, IN_FEATURES)
    params["w_c"], params["b_c"] = _linear_init(k_c, N_C, HIDDEN)
    params["w_phase"], params["b_phase"] = _linear_init(k_p, N_PHASE, HIDDEN)
    return params


def pack_params(params):
    # conv weight (Cout, Cin, kh, kw) -> (kh*kw*Cin, Cout), rows padded to
    # K_PAD, bf16 stream.
    w_conv_mat = jnp.transpose(params["w_conv"], (2, 3, 1, 0)).reshape(
        K_RAW, IN_FEATURES)
    w_conv_mat = jnp.pad(w_conv_mat, ((0, K_PAD - K_RAW), (0, 0)))
    b_conv_row = params["b_conv"].reshape(1, IN_FEATURES).astype(jnp.float32)
    # fc: pre-transposed, HIDDEN padded 100 -> 128, bf16 weight stream.
    w_fc_t = jnp.pad(params["w_fc"].T, ((0, 0), (0, HIDDEN_PAD - HIDDEN)))
    b_fc_row = jnp.pad(params["b_fc"][None, :], ((0, 0), (0, HIDDEN_PAD - HIDDEN)))
    # heads: concatenated (c | phase), padded to a lane-dense (128, 128) block.
    w_cat = jnp.concatenate([params["w_c"].T, params["w_phase"].T], axis=1)
    b_cat = jnp.concatenate([params["b_c"], params["b_phase"]])[None, :]
    return {
        "w_conv_mat": w_conv_mat.astype(jnp.bfloat16),      # (32, 2048) bf16
        "b_conv_row": b_conv_row,                            # (1, 2048) f32
        "w_fc_t": w_fc_t.astype(jnp.bfloat16),               # (2048, 128) bf16
        "b_fc_row": b_fc_row.astype(jnp.float32),            # (1, 128) f32
        "w_heads": jnp.pad(
            w_cat, ((0, HIDDEN_PAD - HIDDEN),
                    (0, HEAD_PAD - (N_C + N_PHASE)))).astype(jnp.float32),
        "b_heads": jnp.pad(
            b_cat, ((0, 0), (0, HEAD_PAD - (N_C + N_PHASE)))).astype(jnp.float32),
    }


# ---------------------------------------------------------------------------
# Full forward (mirrors CNN.forward: returns (c(x), phase(x)))
# ---------------------------------------------------------------------------
def cnn_forward(packed, x_nchw):
    x_nhwc = jnp.transpose(x_nchw, (0, 2, 3, 1)).astype(jnp.bfloat16)
    patches = _im2col(x_nhwc)                              # (B, HW, 32) bf16
    feats = conv_gap_pallas(patches, packed["w_conv_mat"],
                            packed["b_conv_row"])          # (B, 2048) f32
    out_c, out_phase = heads_pallas(feats, packed)         # (B, 7), (B, 10)
    return out_c, out_phase


# ---------------------------------------------------------------------------
# Pure-JAX reference mirroring the kernel's precision choices (bf16 streams,
# f32 accumulation) for a structural sanity check.
# ---------------------------------------------------------------------------
def _reference_forward(params, x_nchw):
    hi = jax.lax.Precision.HIGHEST
    x = jnp.transpose(x_nchw, (0, 2, 3, 1)).astype(jnp.bfloat16)
    p = _im2col(x).astype(jnp.float32)
    w = jnp.transpose(params["w_conv"], (2, 3, 1, 0)).reshape(K_RAW, IN_FEATURES)
    w = jnp.pad(w, ((0, K_PAD - K_RAW), (0, 0)))
    w = w.astype(jnp.bfloat16).astype(jnp.float32)
    fmap = jnp.maximum(
        jnp.einsum("bmk,kn->bmn", p, w, precision=hi) + params["b_conv"], 0.0)
    feats = fmap.mean(axis=1)
    f16 = feats.astype(jnp.bfloat16).astype(jnp.float32)
    wfc = params["w_fc"].T.astype(jnp.bfloat16).astype(jnp.float32)
    h = jnp.dot(f16, wfc, precision=hi) + params["b_fc"]
    c = jnp.dot(h, params["w_c"].T, precision=hi) + params["b_c"]
    ph = jnp.dot(h, params["w_phase"].T, precision=hi) + params["b_phase"]
    return c, ph


if __name__ == "__main__":
    key = jax.random.PRNGKey(0)
    k_param, k_in = jax.random.split(key)
    params = init_params(k_param)
    packed = pack_params(params)

    # PyTorch-style NCHW image input, small shape.
    x = jax.random.normal(k_in, (2, 3, 16, 16), jnp.float32)

    fwd = jax.jit(cnn_forward)
    out_c, out_phase = fwd(packed, x)
    jax.block_until_ready((out_c, out_phase))

    assert out_c.shape == (2, N_C) and out_c.dtype == jnp.float32
    assert out_phase.shape == (2, N_PHASE) and out_phase.dtype == jnp.float32

    ref_c, ref_phase = _reference_forward(params, x)
    assert jnp.allclose(out_c, ref_c, atol=2e-2, rtol=2e-2)
    assert jnp.allclose(out_phase, ref_phase, atol=2e-2, rtol=2e-2)

    print("KERNEL_OK")
</pallas_src>

<mosaic_0001>
module attributes {stable_mosaic.version = 11 : i64} {
  func.func @_conv_gap_kernel(%arg0: i32, %arg1: i32, %arg2: i32, %arg3: memref<1x256x32xbf16, #tpu.memory_space<vmem>>, %arg4: memref<32x512xbf16, #tpu.memory_space<vmem>>, %arg5: memref<1x512xf32, #tpu.memory_space<vmem>>, %arg6: memref<1x1x512xf32, #tpu.memory_space<vmem>>) attributes {dimension_semantics = [#tpu.dimension_semantics<parallel>, #tpu.dimension_semantics<parallel>, #tpu.dimension_semantics<arbitrary>], iteration_bounds = array<i64: 2, 4, 1>, scalar_prefetch = 0 : i64, scratch_operands = 0 : i64, tpu.core_type = #tpu.core_type<tc>, window_params = [{transform_indices = @transform_0, window_bounds = array<i64: 1, 256, 32>}, {transform_indices = @transform_1, window_bounds = array<i64: 32, 512>}, {transform_indices = @transform_2, window_bounds = array<i64: 1, 512>}, {transform_indices = @transform_3, window_bounds = array<i64: 1, 1, 512>}]} {
    %c0_i32 = arith.constant 0 : i32
    %0 = arith.cmpi eq, %arg2, %c0_i32 : i32
    %1 = arith.extui %0 : i1 to i32
    %c0_i32_0 = arith.constant 0 : i32
    %2 = arith.cmpi ne, %1, %c0_i32_0 : i32
    scf.if %2 {
      %cst_18 = arith.constant 0.000000e+00 : f32
      %23 = vector.broadcast %cst_18 : f32 to vector<1x512xf32>
      %c0_19 = arith.constant 0 : index
      %c0_20 = arith.constant 0 : index
      %c0_21 = arith.constant 0 : index
      %24 = vector.load %arg6[%c0_19, %c0_20, %c0_21] : memref<1x1x512xf32, #tpu.memory_space<vmem>>, vector<1x1x512xf32>
      %25 = vector.shape_cast %24 : vector<1x1x512xf32> to vector<1x512xf32>
      %26 = vector.shape_cast %23 : vector<1x512xf32> to vector<1x1x512xf32>
      tpu.vector_store %arg6[%c0_19, %c0_20, %c0_21], %26 {strides = array<i32>} : memref<1x1x512xf32, #tpu.memory_space<vmem>>, vector<1x1x512xf32>,
    } else {
    }
    %c0 = arith.constant 0 : index
    %c0_1 = arith.constant 0 : index
    %c0_2 = arith.constant 0 : index
    %3 = vector.load %arg3[%c0, %c0_1, %c0_2] : memref<1x256x32xbf16, #tpu.memory_space<vmem>>, vector<1x256x32xbf16>
    %4 = vector.shape_cast %3 : vector<1x256x32xbf16> to vector<256x32xbf16>
    %c0_3 = arith.constant 0 : index
    %c0_4 = arith.constant 0 : index
    %5 = vector.load %arg4[%c0_3, %c0_4] : memref<32x512xbf16, #tpu.memory_space<vmem>>, vector<32x512xbf16>
    %cst = arith.constant dense<0.000000e+00> : vector<256x512xf32>
    %6 = tpu.matmul %4, %5, %cst {dimension_numbers = #tpu.dot_dimension_numbers<[1], [0], [0], [1], [0, 0, 1, 1], [], []>} : vector<256x32xbf16>, vector<32x512xbf16>, vector<256x512xf32> -> vector<256x512xf32>
    %c0_5 = arith.constant 0 : index
    %c0_6 = arith.constant 0 : index
    %7 = vector.load %arg5[%c0_5, %c0_6] : memref<1x512xf32, #tpu.memory_space<vmem>>, vector<1x512xf32>
    %8 = vector.broadcast %7 : vector<1x512xf32> to vector<256x512xf32>
    %9 = arith.addf %6, %8 : vector<256x512xf32>
    %cst_7 = arith.constant 0.000000e+00 : f32
    %10 = vector.broadcast %cst_7 : f32 to vector<256x512xf32>
    %11 = arith.maximumf %9, %10 : vector<256x512xf32>
    %cst_8 = arith.constant 1.000000e+00 : f32
    %12 = vector.broadcast %cst_8 : f32 to vector<1x256xf32>
    %c0_9 = arith.constant 0 : index
    %c0_10 = arith.constant 0 : index
    %c0_11 = arith.constant 0 : index
    %13 = vector.load %arg6[%c0_9, %c0_10, %c0_11] : memref<1x1x512xf32, #tpu.memory_space<vmem>>, vector<1x1x512xf32>
    %14 = vector.shape_cast %13 : vector<1x1x512xf32> to vector<1x512xf32>
    %cst_12 = arith.constant dense<0.000000e+00> : vector<1x512xf32>
    %15 = tpu.matmul %12, %11, %cst_12 {dimension_numbers = #tpu.dot_dimension_numbers<[1], [0], [0], [1], [0, 0, 1, 1], [], []>} : vector<1x256xf32>, vector<256x512xf32>, vector<1x512xf32> -> vector<1x512xf32>
    %16 = arith.addf %14, %15 : vector<1x512xf32>
    %c0_13 = arith.constant 0 : index
    %c0_14 = arith.constant 0 : index
    %c0_15 = arith.constant 0 : index
    %17 = vector.load %arg6[%c0_13, %c0_14, %c0_15] : memref<1x1x512xf32, #tpu.memory_space<vmem>>, vector<1x1x512xf32>
    %18 = vector.shape_cast %17 : vector<1x1x512xf32> to vector<1x512xf32>
    %19 = vector.shape_cast %16 : vector<1x512xf32> to vector<1x1x512xf32>
    tpu.vector_store %arg6[%c0_13, %c0_14, %c0_15], %19 {strides = array<i32>} : memref<1x1x512xf32, #tpu.memory_space<vmem>>, vector<1x1x512xf32>,
    %c0_i32_16 = arith.constant 0 : i32
    %20 = arith.cmpi eq, %arg2, %c0_i32_16 : i32
    %21 = arith.extui %20 : i1 to i32
    %c0_i32_17 = arith.constant 0 : i32
    %22 = arith.cmpi ne, %21, %c0_i32_17 : i32
    scf.if %22 {
      %c0_18 = arith.constant 0 : index
      %c0_19 = arith.constant 0 : index
      %c0_20 = arith.constant 0 : index
      %23 = vector.load %arg6[%c0_18, %c0_19, %c0_20] : memref<1x1x512xf32, #tpu.memory_space<vmem>>, vector<1x1x512xf32>
      %24 = vector.shape_cast %23 : vector<1x1x512xf32> to vector<1x512xf32>
      %cst_21 = arith.constant 3.906250e-03 : f32
      %25 = vector.broadcast %cst_21 : f32 to vector<1x512xf32>
      %26 = arith.mulf %24, %25 : vector<1x512xf32>
      %c0_22 = arith.constant 0 : index
      %c0_23 = arith.constant 0 : index
      %c0_24 = arith.constant 0 : index
      %27 = vector.load %arg6[%c0_22, %c0_23, %c0_24] : memref<1x1x512xf32, #tpu.memory_space<vmem>>, vector<1x1x512xf32>
      %28 = vector.shape_cast %27 : vector<1x1x512xf32> to vector<1x512xf32>
      %29 = vector.shape_cast %26 : vector<1x512xf32> to vector<1x1x512xf32>
      tpu.vector_store %arg6[%c0_22, %c0_23, %c0_24], %29 {strides = array<i32>} : memref<1x1x512xf32, #tpu.memory_space<vmem>>, vector<1x1x512xf32>,
    } else {
    }
    return
  }
  func.func @transform_0(%arg0: i32, %arg1: i32, %arg2: i32) -> (i32, i32, i32) {
    %c0_i32 = arith.constant 0 : i32
    %c0_i32_0 = arith.constant 0 : i32
    return %arg0, %arg2, %c0_i32 : i32, i32, i32
  }
  func.func @transform_1(%arg0: i32, %arg1: i32, %arg2: i32) -> (i32, i32) {
    %c0_i32 = arith.constant 0 : i32
    %c0_i32_0 = arith.constant 0 : i32
    return %c0_i32, %arg1 : i32, i32
  }
  func.func @transform_2(%arg0: i32, %arg1: i32, %arg2: i32) -> (i32, i32) {
    %c0_i32 = arith.constant 0 : i32
    %c0_i32_0 = arith.constant 0 : i32
    return %c0_i32, %arg1 : i32, i32
  }
  func.func @transform_3(%arg0: i32, %arg1: i32, %arg2: i32) -> (i32, i32, i32) {
    %c0_i32 = arith.constant 0 : i32
    %c0_i32_0 = arith.constant 0 : i32
    return %arg0, %c0_i32, %arg1 : i32, i32, i32
  }
}

module attributes {stable_mosaic.version = 11 : i64} {
  func.func @_heads_kernel(%arg0: i32, %arg1: memref<2x2048xf32, #tpu.memory_space<vmem>>, %arg2: memref<2048x128xbf16, #tpu.memory_space<vmem>>, %arg3: memref<1x128xf32, #tpu.memory_space<vmem>>, %arg4: memref<128x128xf32, #tpu.memory_space<vmem>>, %arg5: memref<1x128xf32, #tpu.memory_space<vmem>>, %arg6: memref<2x128xf32, #tpu.memory_space<vmem>>) attributes {dimension_semantics = [#tpu.dimension_semantics<parallel>], iteration_bounds = array<i64: 1>, scalar_prefetch = 0 : i64, scratch_operands = 0 : i64, tpu.core_type = #tpu.core_type<tc>, window_params = [{transform_indices = @transform_0, window_bounds = array<i64: 2, 2048>}, {pipeline_mode = #tpu.pipeline_mode<synchronous>, transform_indices = @transform_1, window_bounds = array<i64: 2048, 128>}, {pipeline_mode = #tpu.pipeline_mode<synchronous>, transform_indices = @transform_2, window_bounds = array<i64: 1, 128>}, {pipeline_mode = #tpu.pipeline_mode<synchronous>, transform_indices = @transform_3, window_bounds = array<i64: 128, 128>}, {pipeline_mode = #tpu.pipeline_mode<synchronous>, transform_indices = @transform_4, window_bounds = array<i64: 1, 128>}, {transform_indices = @transform_5, window_bounds = array<i64: 2, 128>}]} {
    %c0 = arith.constant 0 : index
    %c0_0 = arith.constant 0 : index
    %0 = vector.load %arg1[%c0, %c0_0] : memref<2x2048xf32, #tpu.memory_space<vmem>>, vector<2x2048xf32>
    %1 = arith.truncf %0 : vector<2x2048xf32> to vector<2x2048xbf16>
    %c0_1 = arith.constant 0 : index
    %c0_2 = arith.constant 0 : index
    %2 = vector.load %arg2[%c0_1, %c0_2] : memref<2048x128xbf16, #tpu.memory_space<vmem>>, vector<2048x128xbf16>
    %cst = arith.constant dense<0.000000e+00> : vector<2x128xf32>
    %3 = tpu.matmul %1, %2, %cst {dimension_numbers = #tpu.dot_dimension_numbers<[1], [0], [0], [1], [0, 0, 1, 1], [], []>} : vector<2x2048xbf16>, vector<2048x128xbf16>, vector<2x128xf32> -> vector<2x128xf32>
    %c0_3 = arith.constant 0 : index
    %c0_4 = arith.constant 0 : index
    %4 = vector.load %arg3[%c0_3, %c0_4] : memref<1x128xf32, #tpu.memory_space<vmem>>, vector<1x128xf32>
    %5 = vector.broadcast %4 : vector<1x128xf32> to vector<2x128xf32>
    %6 = arith.addf %3, %5 : vector<2x128xf32>
    %c0_5 = arith.constant 0 : index
    %c0_6 = arith.constant 0 : index
    %7 = vector.load %arg4[%c0_5, %c0_6] : memref<128x128xf32, #tpu.memory_space<vmem>>, vector<128x128xf32>
    %cst_7 = arith.constant dense<0.000000e+00> : vector<2x128xf32>
    %8 = tpu.matmul %6, %7, %cst_7 {dimension_numbers = #tpu.dot_dimension_numbers<[1], [0], [0], [1], [0, 0, 1, 1], [], []>} : vector<2x128xf32>, vector<128x128xf32>, vector<2x128xf32> -> vector<2x128xf32>
    %c0_8 = arith.constant 0 : index
    %c0_9 = arith.constant 0 : index
    %9 = vector.load %arg5[%c0_8, %c0_9] : memref<1x128xf32, #tpu.memory_space<vmem>>, vector<1x128xf32>
    %10 = vector.broadcast %9 : vector<1x128xf32> to vector<2x128xf32>
    %11 = arith.addf %8, %10 : vector<2x128xf32>
    %c0_10 = arith.constant 0 : index
    %c0_11 = arith.constant 0 : index
    %12 = vector.load %arg6[%c0_10, %c0_11] : memref<2x128xf32, #tpu.memory_space<vmem>>, vector<2x128xf32>
    tpu.vector_store %arg6[%c0_10, %c0_11], %11 {strides = array<i32>} : memref<2x128xf32, #tpu.memory_space<vmem>>, vector<2x128xf32>,
    return
  }
  func.func @transform_0(%arg0: i32) -> (i32, i32) {
    %c0_i32 = arith.constant 0 : i32
    %c0_i32_0 = arith.constant 0 : i32
    return %arg0, %c0_i32 : i32, i32
  }
  func.func @transform_1(%arg0: i32) -> (i32, i32) {
    %c0_i32 = arith.constant 0 : i32
    %c0_i32_0 = arith.constant 0 : i32
    %c0_i32_1 = arith.constant 0 : i32
    return %c0_i32, %c0_i32_0 : i32, i32
  }
  func.func @transform_2(%arg0: i32) -> (i32, i32) {
    %c0_i32 = arith.constant 0 : i32
    %c0_i32_0 = arith.constant 0 : i32
    %c0_i32_1 = arith.constant 0 : i32
    return %c0_i32, %c0_i32_0 : i32, i32
  }
  func.func @transform_3(%arg0: i32) -> (i32, i32) {
    %c0_i32 = arith.constant 0 : i32
    %c0_i32_0 = arith.constant 0 : i32
    %c0_i32_1 = arith.constant 0 : i32
    return %c0_i32, %c0_i32_0 : i32, i32
  }
  func.func @transform_4(%arg0: i32) -> (i32, i32) {
    %c0_i32 = arith.constant 0 : i32
    %c0_i32_0 = arith.constant 0 : i32
    %c0_i32_1 = arith.constant 0 : i32
    return %c0_i32, %c0_i32_0 : i32, i32
  }
  func.func @transform_5(%arg0: i32) -> (i32, i32) {
    %c0_i32 = arith.constant 0 : i32
    %c0_i32_0 = arith.constant 0 : i32
    return %arg0, %c0_i32 : i32, i32
  }
}

</mosaic_0001>

<llo_original>
// kernel: cnn_forward.2
$region0: #{cnn_forward.2}
  #allocation0 [shape = 'u32[]', space=smem, size = 0x4, offset = 0x4, fixed_abs, tag = 'smem constant byte address 0x4 - core index']
  #allocation1 [shape = 'u32[144,128]{1,0:T(1,128)}', space=vmem, size = 0x12000, scoped, tag = 'internal scratch']
  %s0 = inlined_call_operand.vmem [shape: bf16[2,256,32], index: 0, kind: input, shape index: {}]
  %s1 = inlined_call_operand.vmem [shape: bf16[32,2048], index: 1, kind: input, shape index: {}]
  %s2 = inlined_call_operand.vmem [shape: f32[1,2048], index: 2, kind: input, shape index: {}]
  %s3 = inlined_call_operand.vmem [shape: f32[2,1,2048], index: 3, kind: output, shape index: {}]
  %s4 = sld [smem:[#allocation0]]
  $region76: #{cnn_forward.2} parent=0
    _
  %s6 = ssub.s32 1, %s4
  %s7 = scalar_select 0, %s6, %s4
  $region1: #{cnn_forward.2} parent=0
    #allocation2 [shape = 'u8[65536]{0}', space=vmem, size = 0x10000, scoped, tag = 'input window, operand 1']
    loop: start=0, step=1, limit=10
    $region2: #{cnn_forward.2} parent=1 // loop_pre_header
      _
    $region3: #{cnn_forward.2} parent=1 // loop_header
      %s9 = sphi 0, %s13
      %p10 = scmp.ge.s32.totalorder %s9, 10
      %s16 = sphi 0, %s35
      %s17 = sphi 0, %s31
      %s18 = sphi 0, %s27
      %s19 = sphi 0, %s16
      %s20 = sphi 0, %s17
      %s21 = sphi 0, %s18
      %s22 = sphi 0, %s19
      %s23 = sphi 0, %s20
      %s24 = sphi 0, %s21
      %s40 = sphi 0, %s42
      %s43 = sphi 0, %s40
      %s44 = sphi 0, %s43
      %s60 = sphi 0, %s44
      %s66 = sphi 0, %s68
      %s69 = sphi 0, %s66
      %s70 = sphi 0, %s69
      %s86 = sphi 0, %s70
      %s92 = sphi 0, %s94
      %s95 = sphi 0, %s92
      %s96 = sphi 0, %s95
      %s112 = sphi 0, %s96
      %s120 = sphi 0, %s122
      %s123 = sphi 0, %s120
      %s124 = sphi 0, %s123
      %s140 = sphi 0, %s124
    $region4: #{cnn_forward.2} parent=1 // loop_header_branch
      %12 = sbr.rel (%p10) target = $region8
    $region5: #{cnn_forward.2} parent=1 // loop_body
      %s14 = ssub.s32 %s9, 1
      %s15 = ssub.s32 %s9, 2
      %s25 = sadd.s32 1, %s18
      %p26 = scmp.ge.s32.totalorder %s25, 1
      %s27 = scalar_select %p26, 0, %s25
      %s28 = sadd.s32 1, %s17
      %s29 = scalar_select %p26, %s28, %s17
      %p30 = scmp.ge.s32.totalorder %s29, 4
      %s31 = scalar_select %p30, 0, %s29
      %s32 = sadd.s32 1, %s16
      %s33 = scalar_select %p30, %s32, %s16
      %p34 = scmp.ge.s32.totalorder %s33, 2
      %s35 = scalar_select %p34, 0, %s33
      %s36 = ssub.s32 %s16, %s35
      %s37 = ssub.s32 %s18, %s27
      %s38 = sor.u32 %s36, %s37
      %p39 = scmp.eq.s32.totalorder %s38, 0
      %s41 = sadd.s32 %s40, 1
      %s42 = scalar_select %p39, %s40, %s41
      %p45 = pneg %p39
      %p46 = scmp.eq.s32.totalorder %s9, 7
      %p47 = por %p45, %p46
      %p48 = scmp.ne.s32.totalorder %s40, %s43
      %p49 = scmp.eq.s32.totalorder %s9, 0
      %p50 = por %p48, %p49
      %p51 = scmp.ne.s32.totalorder %s40, %s43
      %p52 = scmp.eq.s32.totalorder %s14, 7
      %p53 = por %p51, %p52
      %p54 = scmp.ne.s32.totalorder %s43, %s44
      %p55 = scmp.eq.s32.totalorder %s14, 0
      %p56 = por %p54, %p55
      %p57 = scmp.ne.s32.totalorder %s43, %s44
      %p58 = scmp.eq.s32.totalorder %s15, 7
      %p59 = por %p57, %p58
      %p61 = scmp.ne.s32.totalorder %s44, %s60
      %p62 = scmp.eq.s32.totalorder %s15, 0
      %p63 = por %p61, %p62
      %s64 = ssub.s32 %s17, %s31
      %p65 = scmp.eq.s32.totalorder %s64, 0
      %s67 = sadd.s32 %s66, 1
      %s68 = scalar_select %p65, %s66, %s67
      %p71 = pneg %p65
      %p72 = scmp.eq.s32.totalorder %s9, 7
      %p73 = por %p71, %p72
      %p74 = scmp.ne.s32.totalorder %s66, %s69
      %p75 = scmp.eq.s32.totalorder %s9, 0
      %p76 = por %p74, %p75
      %p77 = scmp.ne.s32.totalorder %s66, %s69
      %p78 = scmp.eq.s32.totalorder %s14, 7
      %p79 = por %p77, %p78
      %p80 = scmp.ne.s32.totalorder %s69, %s70
      %p81 = scmp.eq.s32.totalorder %s14, 0
      %p82 = por %p80, %p81
      %p83 = scmp.ne.s32.totalorder %s69, %s70
      %p84 = scmp.eq.s32.totalorder %s15, 7
      %p85 = por %p83, %p84
      %p87 = scmp.ne.s32.totalorder %s70, %s86
      %p88 = scmp.eq.s32.totalorder %s15, 0
      %p89 = por %p87, %p88
      %s90 = ssub.s32 %s17, %s31
      %p91 = scmp.eq.s32.totalorder %s90, 0
      %s93 = sadd.s32 %s92, 1
      %s94 = scalar_select %p91, %s92, %s93
      %p97 = pneg %p91
      %p98 = scmp.eq.s32.totalorder %s9, 7
      %p99 = por %p97, %p98
      %p100 = scmp.ne.s32.totalorder %s92, %s95
      %p101 = scmp.eq.s32.totalorder %s9, 0
      %p102 = por %p100, %p101
      %p103 = scmp.ne.s32.totalorder %s92, %s95
      %p104 = scmp.eq.s32.totalorder %s14, 7
      %p105 = por %p103, %p104
      %p106 = scmp.ne.s32.totalorder %s95, %s96
      %p107 = scmp.eq.s32.totalorder %s14, 0
      %p108 = por %p106, %p107
      %p109 = scmp.ne.s32.totalorder %s95, %s96
      %p110 = scmp.eq.s32.totalorder %s15, 7
      %p111 = por %p109, %p110
      %p113 = scmp.ne.s32.totalorder %s96, %s112
      %p114 = scmp.eq.s32.totalorder %s15, 0
      %p115 = por %p113, %p114
      %s116 = ssub.s32 %s16, %s35
      %s117 = ssub.s32 %s17, %s31
      %s118 = sor.u32 %s116, %s117
      %p119 = scmp.eq.s32.totalorder %s118, 0
      %s121 = sadd.s32 %s120, 1
      %s122 = scalar_select %p119, %s120, %s121
      %p125 = pneg %p119
      %p126 = scmp.eq.s32.totalorder %s9, 7
      %p127 = por %p125, %p126
      %p128 = scmp.ne.s32.totalorder %s120, %s123
      %p129 = scmp.eq.s32.totalorder %s9, 0
      %p130 = por %p128, %p129
      %p131 = scmp.ne.s32.totalorder %s120, %s123
      %p132 = scmp.eq.s32.totalorder %s14, 7
      %p133 = por %p131, %p132
      %p134 = scmp.ne.s32.totalorder %s123, %s124
      %p135 = scmp.eq.s32.totalorder %s14, 0
      %p136 = por %p134, %p135
      %p137 = scmp.ne.s32.totalorder %s123, %s124
      %p138 = scmp.eq.s32.totalorder %s15, 7
      %p139 = por %p137, %p138
      %p141 = scmp.ne.s32.totalorder %s124, %s140
      %p142 = scmp.eq.s32.totalorder %s15, 0
      %p143 = por %p141, %p142
      %p144 = scmp.le.s32.totalorder 1, %s9
      %p145 = scmp.lt.s32.totalorder %s9, 9
      %p146 = pnand %p144, %p145
      %p147 = pneg %p146
      // Predicated region
      $region9: #{cnn_forward.2} parent=5 // pred_check
        _
      $region10: #{cnn_forward.2} parent=5 // pred_check_branch
        %149 = sbr.rel (%p146) target = $region12
      $region11: #{cnn_forward.2} parent=5 // pred_region
        %s150 = ssub.s32 %s9, 1
      $region12: #{cnn_forward.2} parent=5 // pred_fallthru
        _
      %p151 = scmp.lt.s32.totalorder %s9, 8
      // Predicated region
      $region13: #{cnn_forward.2} parent=5 // pred_check
        %p152 = pneg %p151
      $region14: #{cnn_forward.2} parent=5 // pred_check_branch
        %154 = sbr.rel (%p152) target = $region16
      $region15: #{cnn_forward.2} parent=5 // pred_region
        // Predicated region
        $region17: #{cnn_forward.2} parent=15 // pred_check
          %p155 = pneg %p50
        $region18: #{cnn_forward.2} parent=15 // pred_check_branch
          %157 = sbr.rel (%p155) target = $region20
        $region19: #{cnn_forward.2} parent=15 // pred_region
          %s158 = smul.u32 32, %s18
          %p159 = scmp.lt.s32.totalorder %s16, 1
          %s160 = scalar_select %p159, %s16, 1
          %p161 = scmp.lt.s32.totalorder %s158, 31
          %s162 = scalar_select %p161, %s158, 31
          %s163 = smul.addr %s160, 32
          %s164 = sadd.s32 %s162, %s163
          %s165 = smul.addr %s164, 4
          %s166 = scalar_lea.vmem %s0, %s165
          %s167 = smul.u32 32, %s18
        $region20: #{cnn_forward.2} parent=15 // pred_fallthru
          _
        // Predicated region
        $region21: #{cnn_forward.2} parent=15 // pred_check
          %p168 = pneg %p76
        $region22: #{cnn_forward.2} parent=15 // pred_check_branch
          %170 = sbr.rel (%p168) target = $region24
        $region23: #{cnn_forward.2} parent=15 // pred_region
          %s171 = sand.u32 %s66, 1
          %s172 = sand.u32 %s66, 1
          %s173 = smul.addr %s172, 64
          %s174 = scalar_lea.vmem [#allocation2], %s173
          %s175 = smul.u32 4, %s17
          %s176 = smul.addr %s175, 4
          %s177 = scalar_lea.vmem %s1, %s176
          // Predicated region
          $region25: #{cnn_forward.2} parent=23 // pred_check
            _
          $region26: #{cnn_forward.2} parent=23 // pred_check_branch
            %179 = sbr.rel (0) target = $region28
          $region27: #{cnn_forward.2} parent=23 // pred_region
            // Predicated region
            $region29: #{cnn_forward.2} parent=27 // pred_check
              _
            $region30: #{cnn_forward.2} parent=27 // pred_check_branch
              %181 = sbr.rel (0) target = $region32
            $region31: #{cnn_forward.2} parent=27 // pred_region
              loop: start=0, step=1, limit=1
              $region33: #{cnn_forward.2} parent=31 // loop_pre_header
                _
              $region34: #{cnn_forward.2} parent=31 // loop_header
                %s183 = sphi 0, %s187
                %p184 = scmp.ge.s32.totalorder %s183, 1
                %s188 = sphi %s177, %s177
                %s189 = sphi %s174, %s174
              $region35: #{cnn_forward.2} parent=31 // loop_header_branch
                %186 = sbr.rel (%p184) target = $region39
              $region36: #{cnn_forward.2} parent=31 // loop_body
                %v190 = vld [vmem:[%s188] sm:$0xff]
                %191 = vst [vmem:[%s189] sm:$0xff] %v190
                %v192 = vld [vmem:[%s188 + $0x8] sm:$0xff]
                %193 = vst [vmem:[%s189 + $0x8] sm:$0xff] %v192
                %v194 = vld [vmem:[%s188 + $0x40] sm:$0xff]
                %195 = vst [vmem:[%s189 + $0x10] sm:$0xff] %v194
                %v196 = vld [vmem:[%s188 + $0x48] sm:$0xff]
                %197 = vst [vmem:[%s189 + $0x18] sm:$0xff] %v196
                %v198 = vld [vmem:[%s188 + $0x80] sm:$0xff]
                %199 = vst [vmem:[%s189 + $0x20] sm:$0xff] %v198
                %v200 = vld [vmem:[%s188 + $0x88] sm:$0xff]
                %201 = vst [vmem:[%s189 + $0x28] sm:$0xff] %v200
                %v202 = vld [vmem:[%s188 + $0xc0] sm:$0xff]
                %203 = vst [vmem:[%s189 + $0x30] sm:$0xff] %v202
                %v204 = vld [vmem:[%s188 + $0xc8] sm:$0xff]
                %205 = vst [vmem:[%s189 + $0x38] sm:$0xff] %v204
              $region37: #{cnn_forward.2} parent=31 // loop_footer
                %s187 = sadd.s32 1, %s183
              $region38: #{cnn_forward.2} parent=31 // loop_footer_branch
                %182 = sbr.rel target = $region34
              $region39: #{cnn_forward.2} parent=31 // loop_exit
                _
            $region32: #{cnn_forward.2} parent=27 // pred_fallthru
              _
            // Predicated region
            $region40: #{cnn_forward.2} parent=27 // pred_check
              _
            $region41: #{cnn_forward.2} parent=27 // pred_check_branch
              %207 = sbr.rel target = $region43
            $region42: #{cnn_forward.2} parent=27 // pred_region
              _
            $region43: #{cnn_forward.2} parent=27 // pred_fallthru
              _
          $region28: #{cnn_forward.2} parent=23 // pred_fallthru
            _
          %208 = vnop
        $region24: #{cnn_forward.2} parent=15 // pred_fallthru
          _
        // Predicated region
        $region44: #{cnn_forward.2} parent=15 // pred_check
          %p209 = pneg %p102
        $region45: #{cnn_forward.2} parent=15 // pred_check_branch
          %211 = sbr.rel (%p209) target = $region47
        $region46: #{cnn_forward.2} parent=15 // pred_region
          %s212 = smul.u32 4, %s17
          %p213 = scmp.lt.s32.totalorder %s212, 15
          %s214 = scalar_select %p213, %s212, 15
          %s215 = scalar_lea.vmem %s2, %s214
          %s216 = smul.u32 4, %s17
        $region47: #{cnn_forward.2} parent=15 // pred_fallthru
          _
      $region16: #{cnn_forward.2} parent=5 // pred_fallthru
        _
      %p217 = scmp.le.s32.totalorder 1, %s9
      %p218 = scmp.lt.s32.totalorder %s9, 9
      %p219 = pnand %p217, %p218
      %p220 = pneg %p219
      // Predicated region
      $region48: #{cnn_forward.2} parent=5 // pred_check
        _
      $region49: #{cnn_forward.2} parent=5 // pred_check_branch
        %222 = sbr.rel (%p219) target = $region51
      $region50: #{cnn_forward.2} parent=5 // pred_region
        %s223 = ssub.s32 %s9, 1
        %s224 = sand.u32 %s69, 1
        %s225 = sand.u32 %s69, 1
        %s226 = smul.addr %s225, 64
        %s227 = scalar_lea.vmem [#allocation2], %s226
        // Predicated region
        $region52: #{cnn_forward.2} parent=50 // pred_check
          %p228 = pneg %p82
        $region53: #{cnn_forward.2} parent=50 // pred_check_branch
          %230 = sbr.rel (%p228) target = $region55
        $region54: #{cnn_forward.2} parent=50 // pred_region
          _
        $region55: #{cnn_forward.2} parent=50 // pred_fallthru
          _
        %s231 = smul.u32 32, %s21
        %p232 = scmp.lt.s32.totalorder %s19, 1
        %s233 = scalar_select %p232, %s19, 1
        %p234 = scmp.lt.s32.totalorder %s231, 31
        %s235 = scalar_select %p234, %s231, 31
        %s236 = smul.addr %s233, 32
        %s237 = sadd.s32 %s235, %s236
        %s238 = smul.addr %s237, 4
        %s239 = scalar_lea.vmem %s0, %s238
        %p240 = pneg %p56
        %p241 = pneg %p53
        %s242 = sand.u32 %s69, 1
        %s243 = sand.u32 %s69, 1
        %s244 = smul.addr %s243, 64
        %s245 = scalar_lea.vmem [#allocation2], %s244
        %p246 = pneg %p82
        %p247 = pneg %p79
        %s248 = smul.u32 4, %s20
        %p249 = scmp.lt.s32.totalorder %s248, 15
        %s250 = scalar_select %p249, %s248, 15
        %s251 = scalar_lea.vmem %s2, %s250
        %p252 = pneg %p108
        %p253 = pneg %p105
        %p254 = pneg %p136
        %p255 = pneg %p133
        %s256 = smul.u32 4, %s20
        %p257 = scmp.lt.s32.totalorder %s19, 1
        %s258 = scalar_select %p257, %s19, 1
        %p259 = scmp.lt.s32.totalorder %s256, 15
        %s260 = scalar_select %p259, %s256, 15
        %s261 = smul.addr %s258, 16
        %s262 = sadd.s32 %s260, %s261
        %s263 = scalar_lea.vmem %s3, %s262
        %s264 = smul.u32 32, %s21
        %p265 = scmp.lt.s32.totalorder %s19, 1
        %s266 = scalar_select %p265, %s19, 1
        %p267 = scmp.lt.s32.totalorder %s264, 31
        %s268 = scalar_select %p267, %s264, 31
        %s269 = smul.addr %s266, 32
        %s270 = sadd.s32 %s268, %s269
        %s271 = smul.addr %s270, 4
        %s272 = scalar_lea.vmem %s0, %s271
        %s273 = smul.u32 32, %s21
        %s274 = smul.u32 4, %s20
        %s275 = smul.u32 4, %s20
        %p276 = scmp.lt.s32.totalorder %s275, 15
        %s277 = scalar_select %p276, %s275, 15
        %s278 = scalar_lea.vmem %s2, %s277
        %s279 = smul.u32 4, %s20
        %s280 = smul.u32 4, %s20
        %p281 = scmp.lt.s32.totalorder %s19, 1
        %s282 = scalar_select %p281, %s19, 1
        %p283 = scmp.lt.s32.totalorder %s280, 15
        %s284 = scalar_select %p283, %s280, 15
        %s285 = smul.addr %s282, 16
        %s286 = sadd.s32 %s284, %s285
        %s287 = scalar_lea.vmem %s3, %s286
        %s288 = smul.u32 4, %s20
        %p290 = scmp.eq.s32.totalorder %s21, 0
        // Predicated region
        $region56: #{cnn_forward.2} parent=50 // pred_check
          %p291 = pneg %p290
        $region57: #{cnn_forward.2} parent=50 // pred_check_branch
          %293 = sbr.rel (%p291) target = $region59
        $region58: #{cnn_forward.2} parent=50 // pred_region
          %v294 = vlaneseq
          %vm295 = vcmp.ge.s32.totalorder %v294, 0
          %vm296 = vcmp.lt.s32.totalorder %v294, 512
          %vm297 = vmand %vm295, %vm296
          %298 = vst.msk [vmem:[%s287] sm:$0xf] %vm297, 0.0
        $region59: #{cnn_forward.2} parent=50 // pred_fallthru
          _
        %v299 = vld [vmem:[%s272] sm:$0xf]
        %v300 = vld [vmem:[%s272 + $0x4] sm:$0xf]
        %v301 = vld [vmem:[%s272 + $0x8] sm:$0xf]
        %v302 = vld [vmem:[%s272 + $0xc] sm:$0xf]
        %v303 = vld [vmem:[%s272 + $0x10] sm:$0xf]
        %v304 = vld [vmem:[%s272 + $0x14] sm:$0xf]
        %v305 = vld [vmem:[%s272 + $0x18] sm:$0xf]
        %v306 = vld [vmem:[%s272 + $0x1c] sm:$0xf]
        %v307 = vld [vmem:[%s272 + $0x20] sm:$0xf]
        %v308 = vld [vmem:[%s272 + $0x24] sm:$0xf]
        %v309 = vld [vmem:[%s272 + $0x28] sm:$0xf]
        %v310 = vld [vmem:[%s272 + $0x2c] sm:$0xf]
        %v311 = vld [vmem:[%s272 + $0x30] sm:$0xf]
        %v312 = vld [vmem:[%s272 + $0x34] sm:$0xf]
        %v313 = vld [vmem:[%s272 + $0x38] sm:$0xf]
        %v314 = vld [vmem:[%s272 + $0x3c] sm:$0xf]
        %v315 = vld [vmem:[%s272 + $0x40] sm:$0xf]
        %v316 = vld [vmem:[%s272 + $0x44] sm:$0xf]
        %v317 = vld [vmem:[%s272 + $0x48] sm:$0xf]
        %v318 = vld [vmem:[%s272 + $0x4c] sm:$0xf]
        %v319 = vld [vmem:[%s272 + $0x50] sm:$0xf]
        %v320 = vld [vmem:[%s272 + $0x54] sm:$0xf]
        %v321 = vld [vmem:[%s272 + $0x58] sm:$0xf]
        %v322 = vld [vmem:[%s272 + $0x5c] sm:$0xf]
        %v323 = vld [vmem:[%s272 + $0x60] sm:$0xf]
        %v324 = vld [vmem:[%s272 + $0x64] sm:$0xf]
        %v325 = vld [vmem:[%s272 + $0x68] sm:$0xf]
        %v326 = vld [vmem:[%s272 + $0x6c] sm:$0xf]
        %v327 = vld [vmem:[%s272 + $0x70] sm:$0xf]
        %v328 = vld [vmem:[%s272 + $0x74] sm:$0xf]
        %v329 = vld [vmem:[%s272 + $0x78] sm:$0xf]
        %v330 = vld [vmem:[%s272 + $0x7c] sm:$0xf]
        %v331 = vld [vmem:[%s227] sm:$0xff]
        %v332 = vld [vmem:[%s227 + $0x8] sm:$0xff]
        %v333 = vld [vmem:[%s227 + $0x10] sm:$0xff]
        %v334 = vld [vmem:[%s227 + $0x18] sm:$0xff]
        %v335 = vld [vmem:[%s227 + $0x20] sm:$0xff]
        %v336 = vld [vmem:[%s227 + $0x28] sm:$0xff]
        %v337 = vld [vmem:[%s227 + $0x30] sm:$0xff]
        %v338 = vld [vmem:[%s227 + $0x38] sm:$0xff]
        %v339 = vld [vmem:[%s278] sm:$0xf]
        %v341 = vlaneseq
        %v342 = vshrl.u32 %v341, 7
        %v343 = vsub.s32 0, %v342
        %v344 = vrot.slane %v339, %v343
        %v345 = vlaneseq
        %v346 = vshrl.u32 %v345, 7
        %v347 = vsub.s32 1, %v346
        %v348 = vrot.slane %v339, %v347
        %v349 = vlaneseq
        %v350 = vshrl.u32 %v349, 7
        %v351 = vsub.s32 2, %v350
        %v352 = vrot.slane %v339, %v351
        %v353 = vlaneseq
        %v354 = vshrl.u32 %v353, 7
        %v355 = vsub.s32 3, %v354
        %v356 = vrot.slane %v339, %v355
        %v393 = vunpack.c.l.b16 %v299
        %v394 = vunpack.c.l.b16 %v300
        %v395 = vunpack.c.l.b16 %v301
        %v396 = vunpack.c.l.b16 %v302
        %v397 = vunpack.c.l.b16 %v303
        %v398 = vunpack.c.l.b16 %v304
        %v399 = vunpack.c.l.b16 %v305
        %v400 = vunpack.c.l.b16 %v306
        %v401 = vunpack.c.l.b16 %v307
        %v402 = vunpack.c.l.b16 %v308
        %v403 = vunpack.c.l.b16 %v309
        %v404 = vunpack.c.l.b16 %v310
        %v405 = vunpack.c.l.b16 %v311
        %v406 = vunpack.c.l.b16 %v312
        %v407 = vunpack.c.l.b16 %v313
        %v408 = vunpack.c.l.b16 %v314
        %v409 = vunpack.c.l.b16 %v315
        %v410 = vunpack.c.l.b16 %v316
        %v411 = vunpack.c.l.b16 %v317
        %v412 = vunpack.c.l.b16 %v318
        %v413 = vunpack.c.l.b16 %v319
        %v414 = vunpack.c.l.b16 %v320
        %v415 = vunpack.c.l.b16 %v321
        %v416 = vunpack.c.l.b16 %v322
        %v417 = vunpack.c.l.b16 %v323
        %v418 = vunpack.c.l.b16 %v324
        %v419 = vunpack.c.l.b16 %v325
        %v420 = vunpack.c.l.b16 %v326
        %v421 = vunpack.c.l.b16 %v327
        %v422 = vunpack.c.l.b16 %v328
        %v423 = vunpack.c.l.b16 %v329
        %v424 = vunpack.c.l.b16 %v330
        %v425 = vpack.c.b16 %v394, %v393
        %v426 = vpack.c.b16 %v396, %v395
        %v427 = vpack.c.b16 %v398, %v397
        %v428 = vpack.c.b16 %v400, %v399
        %v429 = vpack.c.b16 %v402, %v401
        %v430 = vpack.c.b16 %v404, %v403
        %v431 = vpack.c.b16 %v406, %v405
        %v432 = vpack.c.b16 %v408, %v407
        %v433 = vpack.c.b16 %v410, %v409
        %v434 = vpack.c.b16 %v412, %v411
        %v435 = vpack.c.b16 %v414, %v413
        %v436 = vpack.c.b16 %v416, %v415
        %v437 = vpack.c.b16 %v418, %v417
        %v438 = vpack.c.b16 %v420, %v419
        %v439 = vpack.c.b16 %v422, %v421
        %v440 = vpack.c.b16 %v424, %v423
        %v449 = vunpack.c.l.b16 %v331
        %v450 = vunpack.c.h.b16 %v331
        %v451 = vunpack.c.l.b16 %v332
        %v452 = vunpack.c.h.b16 %v332
        %v453 = vunpack.c.l.b16 %v333
        %v454 = vunpack.c.h.b16 %v333
        %v455 = vunpack.c.l.b16 %v334
        %v456 = vunpack.c.h.b16 %v334
        %v457 = vunpack.c.l.b16 %v335
        %v458 = vunpack.c.h.b16 %v335
        %v459 = vunpack.c.l.b16 %v336
        %v460 = vunpack.c.h.b16 %v336
        %v461 = vunpack.c.l.b16 %v337
        %v462 = vunpack.c.h.b16 %v337
        %v463 = vunpack.c.l.b16 %v338
        %v464 = vunpack.c.h.b16 %v338
        %v465 = vpack.c.b16 %v453, %v449
        %v466 = vpack.c.b16 %v454, %v450
        %v467 = vpack.c.b16 %v455, %v451
        %v468 = vpack.c.b16 %v456, %v452
        %v469 = vpack.c.b16 %v461, %v457
        %v470 = vpack.c.b16 %v462, %v458
        %v471 = vpack.c.b16 %v463, %v459
        %v472 = vpack.c.b16 %v464, %v460
        %vm481 = vcmask 261120
        %v483 = vsel %vm481, %v425, 0
        %v486 = vsel %vm481, %v426, 0
        %v489 = vsel %vm481, %v427, 0
        %v492 = vsel %vm481, %v428, 0
        %v495 = vsel %vm481, %v429, 0
        %v498 = vsel %vm481, %v430, 0
        %v501 = vsel %vm481, %v431, 0
        %v504 = vsel %vm481, %v432, 0
        %v507 = vsel %vm481, %v433, 0
        %v510 = vsel %vm481, %v434, 0
        %v513 = vsel %vm481, %v435, 0
        %v516 = vsel %vm481, %v436, 0
        %v519 = vsel %vm481, %v437, 0
        %v522 = vsel %vm481, %v438, 0
        %v525 = vsel %vm481, %v439, 0
        %v528 = vsel %vm481, %v440, 0
        %530 = vmatprep.subr.bf16.mxu0 %v466
        %531 = vmatpush1.bf16.msra.mxu0 %v465
        %532 = vmatprep.subr.bf16.mxu0 %v470
        %533 = vmatpush1.bf16.msra.mxu0 %v469
        %534 = vmatprep.subr.bf16.mxu0 0
        %535 = vmatpush1.bf16.msra.mxu0 0
        %536 = vmatprep.subr.bf16.mxu0 0
        %537 = vmatpush1.bf16.msra.mxu0 0
        %538 = vmatprep.subr.bf16.mxu0 0
        %539 = vmatpush1.bf16.msra.mxu0 0
        %540 = vmatprep.subr.bf16.mxu0 0
        %541 = vmatpush1.bf16.msra.mxu0 0
        %542 = vmatprep.subr.bf16.mxu0 0
        %543 = vmatpush1.bf16.msra.mxu0 0
        %544 = vmatprep.subr.bf16.mxu0 0
        %545 = vmatpush1.bf16.msra.mxu0 0
        %546 = vmatprep.subr.bf16.mxu0 0
        %547 = vmatpush1.bf16.msra.mxu0 0
        %548 = vmatprep.subr.bf16.mxu0 0
        %549 = vmatpush1.bf16.msra.mxu0 0
        %550 = vmatprep.subr.bf16.mxu0 0
        %551 = vmatpush1.bf16.msra.mxu0 0
        %552 = vmatprep.subr.bf16.mxu0 0
        %553 = vmatpush1.bf16.msra.mxu0 0
        %554 = vmatprep.subr.bf16.mxu0 0
        %555 = vmatpush1.bf16.msra.mxu0 0
        %556 = vmatprep.subr.bf16.mxu0 0
        %557 = vmatpush1.bf16.msra.mxu0 0
        %558 = vmatprep.subr.bf16.mxu0 0
        %559 = vmatpush1.bf16.msra.mxu0 0
        %560 = vmatprep.subr.bf16.mxu0 0
        %561 = vmatpush1.bf16.msra.mxu0 0
        %562 = vmatprep.mubr.bf16.mxu0 0
        %563 = vmatmul.mubr.bf16.gmra.mrb[0].mxu0 %v483
        %v564 = vpop.f32.mrb[0].mxu0
        %v565 = vadd.f32 %v344, %v564
        %v566 = vpop.f32.mrb[0].mxu0
        %v567 = vadd.f32 %v348, %v566
        %v568 = vpop.f32.mrb[0].mxu0
        %v569 = vadd.f32 %v344, %v568
        %v570 = vpop.f32.mrb[0].mxu0
        %v571 = vadd.f32 %v348, %v570
        %572 = vmatprep.mubr.bf16.mxu0 0
        %573 = vmatmul.mubr.bf16.gmra.mrb[0].mxu0 %v486
        %v574 = vpop.f32.mrb[0].mxu0
        %v575 = vadd.f32 %v344, %v574
        %v576 = vpop.f32.mrb[0].mxu0
        %v577 = vadd.f32 %v348, %v576
        %v578 = vpop.f32.mrb[0].mxu0
        %v579 = vadd.f32 %v344, %v578
        %v580 = vpop.f32.mrb[0].mxu0
        %v581 = vadd.f32 %v348, %v580
        %582 = vmatprep.mubr.bf16.mxu0 0
        %583 = vmatmul.mubr.bf16.gmra.mrb[0].mxu0 %v489
        %v584 = vpop.f32.mrb[0].mxu0
        %v585 = vadd.f32 %v344, %v584
        %v586 = vpop.f32.mrb[0].mxu0
        %v587 = vadd.f32 %v348, %v586
        %v588 = vpop.f32.mrb[0].mxu0
        %v589 = vadd.f32 %v344, %v588
        %v590 = vpop.f32.mrb[0].mxu0
        %v591 = vadd.f32 %v348, %v590
        %592 = vmatprep.mubr.bf16.mxu0 0
        %593 = vmatmul.mubr.bf16.gmra.mrb[0].mxu0 %v492
        %v594 = vpop.f32.mrb[0].mxu0
        %v595 = vadd.f32 %v344, %v594
        %v596 = vpop.f32.mrb[0].mxu0
        %v597 = vadd.f32 %v348, %v596
        %v598 = vpop.f32.mrb[0].mxu0
        %v599 = vadd.f32 %v344, %v598
        %v600 = vpop.f32.mrb[0].mxu0
        %v601 = vadd.f32 %v348, %v600
        %602 = vmatprep.mubr.bf16.mxu0 0
        %603 = vmatmul.mubr.bf16.gmra.mrb[0].mxu0 %v495
        %v604 = vpop.f32.mrb[0].mxu0
        %v605 = vadd.f32 %v344, %v604
        %v606 = vpop.f32.mrb[0].mxu0
        %v607 = vadd.f32 %v348, %v606
        %v608 = vpop.f32.mrb[0].mxu0
        %v609 = vadd.f32 %v344, %v608
        %v610 = vpop.f32.mrb[0].mxu0
        %v611 = vadd.f32 %v348, %v610
        %612 = vmatprep.mubr.bf16.mxu0 0
        %613 = vmatmul.mubr.bf16.gmra.mrb[0].mxu0 %v498
        %v614 = vpop.f32.mrb[0].mxu0
        %v615 = vadd.f32 %v344, %v614
        %v616 = vpop.f32.mrb[0].mxu0
        %v617 = vadd.f32 %v348, %v616
        %v618 = vpop.f32.mrb[0].mxu0
        %v619 = vadd.f32 %v344, %v618
        %v620 = vpop.f32.mrb[0].mxu0
        %v621 = vadd.f32 %v348, %v620
        %622 = vmatprep.mubr.bf16.mxu0 0
        %623 = vmatmul.mubr.bf16.gmra.mrb[0].mxu0 %v501
        %v624 = vpop.f32.mrb[0].mxu0
        %v625 = vadd.f32 %v344, %v624
        %v626 = vpop.f32.mrb[0].mxu0
        %v627 = vadd.f32 %v348, %v626
        %v628 = vpop.f32.mrb[0].mxu0
        %v629 = vadd.f32 %v344, %v628
        %v630 = vpop.f32.mrb[0].mxu0
        %v631 = vadd.f32 %v348, %v630
        %632 = vmatprep.mubr.bf16.mxu0 0
        %633 = vmatmul.mubr.bf16.gmra.mrb[0].mxu0 %v504
        %v634 = vpop.f32.mrb[0].mxu0
        %v635 = vadd.f32 %v344, %v634
        %v636 = vpop.f32.mrb[0].mxu0
        %v637 = vadd.f32 %v348, %v636
        %v638 = vpop.f32.mrb[0].mxu0
        %v639 = vadd.f32 %v344, %v638
        %v640 = vpop.f32.mrb[0].mxu0
        %v641 = vadd.f32 %v348, %v640
        %642 = vmatprep.mubr.bf16.mxu0 0
        %643 = vmatmul.mubr.bf16.gmra.mrb[0].mxu0 %v507
        %v644 = vpop.f32.mrb[0].mxu0
        %v645 = vadd.f32 %v344, %v644
        %v646 = vpop.f32.mrb[0].mxu0
        %v647 = vadd.f32 %v348, %v646
        %v648 = vpop.f32.mrb[0].mxu0
        %v649 = vadd.f32 %v344, %v648
        %v650 = vpop.f32.mrb[0].mxu0
        %v651 = vadd.f32 %v348, %v650
        %652 = vmatprep.mubr.bf16.mxu0 0
        %653 = vmatmul.mubr.bf16.gmra.mrb[0].mxu0 %v510
        %v654 = vpop.f32.mrb[0].mxu0
        %v655 = vadd.f32 %v344, %v654
        %v656 = vpop.f32.mrb[0].mxu0
        %v657 = vadd.f32 %v348, %v656
        %v658 = vpop.f32.mrb[0].mxu0
        %v659 = vadd.f32 %v344, %v658
        %v660 = vpop.f32.mrb[0].mxu0
        %v661 = vadd.f32 %v348, %v660
        %662 = vmatprep.mubr.bf16.mxu0 0
        %663 = vmatmul.mubr.bf16.gmra.mrb[0].mxu0 %v513
        %v664 = vpop.f32.mrb[0].mxu0
        %v665 = vadd.f32 %v344, %v664
        %v666 = vpop.f32.mrb[0].mxu0
        %v667 = vadd.f32 %v348, %v666
        %v668 = vpop.f32.mrb[0].mxu0
        %v669 = vadd.f32 %v344, %v668
        %v670 = vpop.f32.mrb[0].mxu0
        %v671 = vadd.f32 %v348, %v670
        %672 = vmatprep.mubr.bf16.mxu0 0
        %673 = vmatmul.mubr.bf16.gmra.mrb[0].mxu0 %v516
        %v674 = vpop.f32.mrb[0].mxu0
        %v675 = vadd.f32 %v344, %v674
        %v676 = vpop.f32.mrb[0].mxu0
        %v677 = vadd.f32 %v348, %v676
        %v678 = vpop.f32.mrb[0].mxu0
        %v679 = vadd.f32 %v344, %v678
        %v680 = vpop.f32.mrb[0].mxu0
        %v681 = vadd.f32 %v348, %v680
        %682 = vmatprep.mubr.bf16.mxu0 0
        %683 = vmatmul.mubr.bf16.gmra.mrb[0].mxu0 %v519
        %v684 = vpop.f32.mrb[0].mxu0
        %v685 = vadd.f32 %v344, %v684
        %v686 = vpop.f32.mrb[0].mxu0
        %v687 = vadd.f32 %v348, %v686
        %v688 = vpop.f32.mrb[0].mxu0
        %v689 = vadd.f32 %v344, %v688
        %v690 = vpop.f32.mrb[0].mxu0
        %v691 = vadd.f32 %v348, %v690
        %692 = vmatprep.mubr.bf16.mxu0 0
        %693 = vmatmul.mubr.bf16.gmra.mrb[0].mxu0 %v522
        %v694 = vpop.f32.mrb[0].mxu0
        %v695 = vadd.f32 %v344, %v694
        %v696 = vpop.f32.mrb[0].mxu0
        %v697 = vadd.f32 %v348, %v696
        %v698 = vpop.f32.mrb[0].mxu0
        %v699 = vadd.f32 %v344, %v698
        %v700 = vpop.f32.mrb[0].mxu0
        %v701 = vadd.f32 %v348, %v700
        %702 = vmatprep.mubr.bf16.mxu0 0
        %703 = vmatmul.mubr.bf16.gmra.mrb[0].mxu0 %v525
        %v704 = vpop.f32.mrb[0].mxu0
        %v705 = vadd.f32 %v344, %v704
        %v706 = vpop.f32.mrb[0].mxu0
        %v707 = vadd.f32 %v348, %v706
        %v708 = vpop.f32.mrb[0].mxu0
        %v709 = vadd.f32 %v344, %v708
        %v710 = vpop.f32.mrb[0].mxu0
        %v711 = vadd.f32 %v348, %v710
        %712 = vmatprep.mubr.bf16.mxu0 0
        %713 = vmatmul.mubr.bf16.gmra.mrb[0].mxu0 %v528
        %v714 = vpop.f32.mrb[0].mxu0
        %v715 = vadd.f32 %v344, %v714
        %v716 = vpop.f32.mrb[0].mxu0
        %v717 = vadd.f32 %v348, %v716
        %v718 = vpop.f32.mrb[0].mxu0
        %v719 = vadd.f32 %v344, %v718
        %v720 = vpop.f32.mrb[0].mxu0
        %v721 = vadd.f32 %v348, %v720
        %722 = vdwg.mxu0
        %723 = vmatprep.subr.bf16.mxu0 %v468
        %724 = vmatpush1.bf16.msra.mxu0 %v467
        %725 = vmatprep.subr.bf16.mxu0 %v472
        %726 = vmatpush1.bf16.msra.mxu0 %v471
        %727 = vmatprep.subr.bf16.mxu0 0
        %728 = vmatpush1.bf16.msra.mxu0 0
        %729 = vmatprep.subr.bf16.mxu0 0
        %730 = vmatpush1.bf16.msra.mxu0 0
        %731 = vmatprep.subr.bf16.mxu0 0
        %732 = vmatpush1.bf16.msra.mxu0 0
        %733 = vmatprep.subr.bf16.mxu0 0
        %734 = vmatpush1.bf16.msra.mxu0 0
        %735 = vmatprep.subr.bf16.mxu0 0
        %736 = vmatpush1.bf16.msra.mxu0 0
        %737 = vmatprep.subr.bf16.mxu0 0
        %738 = vmatpush1.bf16.msra.mxu0 0
        %739 = vmatprep.subr.bf16.mxu0 0
        %740 = vmatpush1.bf16.msra.mxu0 0
        %741 = vmatprep.subr.bf16.mxu0 0
        %742 = vmatpush1.bf16.msra.mxu0 0
        %743 = vmatprep.subr.bf16.mxu0 0
        %744 = vmatpush1.bf16.msra.mxu0 0
        %745 = vmatprep.subr.bf16.mxu0 0
        %746 = vmatpush1.bf16.msra.mxu0 0
        %747 = vmatprep.subr.bf16.mxu0 0
        %748 = vmatpush1.bf16.msra.mxu0 0
        %749 = vmatprep.subr.bf16.mxu0 0
        %750 = vmatpush1.bf16.msra.mxu0 0
        %751 = vmatprep.subr.bf16.mxu0 0
        %752 = vmatpush1.bf16.msra.mxu0 0
        %753 = vmatprep.subr.bf16.mxu0 0
        %754 = vmatpush1.bf16.msra.mxu0 0
        %755 = vmatprep.mubr.bf16.mxu0 0
        %756 = vmatmul.mubr.bf16.gmra.mrb[0].mxu0 %v483
        %v757 = vpop.f32.mrb[0].mxu0
        %v758 = vadd.f32 %v352, %v757
        %v759 = vpop.f32.mrb[0].mxu0
        %v760 = vadd.f32 %v356, %v759
        %v761 = vpop.f32.mrb[0].mxu0
        %v762 = vadd.f32 %v352, %v761
        %v763 = vpop.f32.mrb[0].mxu0
        %v764 = vadd.f32 %v356, %v763
        %765 = vmatprep.mubr.bf16.mxu0 0
        %766 = vmatmul.mubr.bf16.gmra.mrb[0].mxu0 %v486
        %v767 = vpop.f32.mrb[0].mxu0
        %v768 = vadd.f32 %v352, %v767
        %v769 = vpop.f32.mrb[0].mxu0
        %v770 = vadd.f32 %v356, %v769
        %v771 = vpop.f32.mrb[0].mxu0
        %v772 = vadd.f32 %v352, %v771
        %v773 = vpop.f32.mrb[0].mxu0
        %v774 = vadd.f32 %v356, %v773
        %775 = vmatprep.mubr.bf16.mxu0 0
        %776 = vmatmul.mubr.bf16.gmra.mrb[0].mxu0 %v489
        %v777 = vpop.f32.mrb[0].mxu0
        %v778 = vadd.f32 %v352, %v777
        %v779 = vpop.f32.mrb[0].mxu0
        %v780 = vadd.f32 %v356, %v779
        %v781 = vpop.f32.mrb[0].mxu0
        %v782 = vadd.f32 %v352, %v781
        %v783 = vpop.f32.mrb[0].mxu0
        %v784 = vadd.f32 %v356, %v783
        %785 = vmatprep.mubr.bf16.mxu0 0
        %786 = vmatmul.mubr.bf16.gmra.mrb[0].mxu0 %v492
        %v787 = vpop.f32.mrb[0].mxu0
        %v788 = vadd.f32 %v352, %v787
        %v789 = vpop.f32.mrb[0].mxu0
        %v790 = vadd.f32 %v356, %v789
        %v791 = vpop.f32.mrb[0].mxu0
        %v792 = vadd.f32 %v352, %v791
        %v793 = vpop.f32.mrb[0].mxu0
        %v794 = vadd.f32 %v356, %v793
        %795 = vmatprep.mubr.bf16.mxu0 0
        %796 = vmatmul.mubr.bf16.gmra.mrb[0].mxu0 %v495
        %v797 = vpop.f32.mrb[0].mxu0
        %v798 = vadd.f32 %v352, %v797
        %v799 = vpop.f32.mrb[0].mxu0
        %v800 = vadd.f32 %v356, %v799
        %v801 = vpop.f32.mrb[0].mxu0
        %v802 = vadd.f32 %v352, %v801
        %v803 = vpop.f32.mrb[0].mxu0
        %v804 = vadd.f32 %v356, %v803
        %805 = vmatprep.mubr.bf16.mxu0 0
        %806 = vmatmul.mubr.bf16.gmra.mrb[0].mxu0 %v498
        %v807 = vpop.f32.mrb[0].mxu0
        %v808 = vadd.f32 %v352, %v807
        %v809 = vpop.f32.mrb[0].mxu0
        %v810 = vadd.f32 %v356, %v809
        %v811 = vpop.f32.mrb[0].mxu0
        %v812 = vadd.f32 %v352, %v811
        %v813 = vpop.f32.mrb[0].mxu0
        %v814 = vadd.f32 %v356, %v813
        %815 = vmatprep.mubr.bf16.mxu0 0
        %816 = vmatmul.mubr.bf16.gmra.mrb[0].mxu0 %v501
        %v817 = vpop.f32.mrb[0].mxu0
        %v818 = vadd.f32 %v352, %v817
        %v819 = vpop.f32.mrb[0].mxu0
        %v820 = vadd.f32 %v356, %v819
        %v821 = vpop.f32.mrb[0].mxu0
        %v822 = vadd.f32 %v352, %v821
        %v823 = vpop.f32.mrb[0].mxu0
        %v824 = vadd.f32 %v356, %v823
        %825 = vmatprep.mubr.bf16.mxu0 0
        %826 = vmatmul.mubr.bf16.gmra.mrb[0].mxu0 %v504
        %v827 = vpop.f32.mrb[0].mxu0
        %v828 = vadd.f32 %v352, %v827
        %v829 = vpop.f32.mrb[0].mxu0
        %v830 = vadd.f32 %v356, %v829
        %v831 = vpop.f32.mrb[0].mxu0
        %v832 = vadd.f32 %v352, %v831
        %v833 = vpop.f32.mrb[0].mxu0
        %v834 = vadd.f32 %v356, %v833
        %835 = vmatprep.mubr.bf16.mxu0 0
        %836 = vmatmul.mubr.bf16.gmra.mrb[0].mxu0 %v507
        %v837 = vpop.f32.mrb[0].mxu0
        %v838 = vadd.f32 %v352, %v837
        %v839 = vpop.f32.mrb[0].mxu0
        %v840 = vadd.f32 %v356, %v839
        %v841 = vpop.f32.mrb[0].mxu0
        %v842 = vadd.f32 %v352, %v841
        %v843 = vpop.f32.mrb[0].mxu0
        %v844 = vadd.f32 %v356, %v843
        %845 = vmatprep.mubr.bf16.mxu0 0
        %846 = vmatmul.mubr.bf16.gmra.mrb[0].mxu0 %v510
        %v847 = vpop.f32.mrb[0].mxu0
        %v848 = vadd.f32 %v352, %v847
        %v849 = vpop.f32.mrb[0].mxu0
        %v850 = vadd.f32 %v356, %v849
        %v851 = vpop.f32.mrb[0].mxu0
        %v852 = vadd.f32 %v352, %v851
        %v853 = vpop.f32.mrb[0].mxu0
        %v854 = vadd.f32 %v356, %v853
        %855 = vmatprep.mubr.bf16.mxu0 0
        %856 = vmatmul.mubr.bf16.gmra.mrb[0].mxu0 %v513
        %v857 = vpop.f32.mrb[0].mxu0
        %v858 = vadd.f32 %v352, %v857
        %v859 = vpop.f32.mrb[0].mxu0
        %v860 = vadd.f32 %v356, %v859
        %v861 = vpop.f32.mrb[0].mxu0
        %v862 = vadd.f32 %v352, %v861
        %v863 = vpop.f32.mrb[0].mxu0
        %v864 = vadd.f32 %v356, %v863
        %865 = vmatprep.mubr.bf16.mxu0 0
        %866 = vmatmul.mubr.bf16.gmra.mrb[0].mxu0 %v516
        %v867 = vpop.f32.mrb[0].mxu0
        %v868 = vadd.f32 %v352, %v867
        %v869 = vpop.f32.mrb[0].mxu0
        %v870 = vadd.f32 %v356, %v869
        %v871 = vpop.f32.mrb[0].mxu0
        %v872 = vadd.f32 %v352, %v871
        %v873 = vpop.f32.mrb[0].mxu0
        %v874 = vadd.f32 %v356, %v873
        %875 = vmatprep.mubr.bf16.mxu0 0
        %876 = vmatmul.mubr.bf16.gmra.mrb[0].mxu0 %v519
        %v877 = vpop.f32.mrb[0].mxu0
        %v878 = vadd.f32 %v352, %v877
        %v879 = vpop.f32.mrb[0].mxu0
        %v880 = vadd.f32 %v356, %v879
        %v881 = vpop.f32.mrb[0].mxu0
        %v882 = vadd.f32 %v352, %v881
        %v883 = vpop.f32.mrb[0].mxu0
        %v884 = vadd.f32 %v356, %v883
        %885 = vmatprep.mubr.bf16.mxu0 0
        %886 = vmatmul.mubr.bf16.gmra.mrb[0].mxu0 %v522
        %v887 = vpop.f32.mrb[0].mxu0
        %v888 = vadd.f32 %v352, %v887
        %v889 = vpop.f32.mrb[0].mxu0
        %v890 = vadd.f32 %v356, %v889
        %v891 = vpop.f32.mrb[0].mxu0
        %v892 = vadd.f32 %v352, %v891
        %v893 = vpop.f32.mrb[0].mxu0
        %v894 = vadd.f32 %v356, %v893
        %895 = vmatprep.mubr.bf16.mxu0 0
        %896 = vmatmul.mubr.bf16.gmra.mrb[0].mxu0 %v525
        %v897 = vpop.f32.mrb[0].mxu0
        %v898 = vadd.f32 %v352, %v897
        %v899 = vpop.f32.mrb[0].mxu0
        %v900 = vadd.f32 %v356, %v899
        %v901 = vpop.f32.mrb[0].mxu0
        %v902 = vadd.f32 %v352, %v901
        %v903 = vpop.f32.mrb[0].mxu0
        %v904 = vadd.f32 %v356, %v903
        %905 = vmatprep.mubr.bf16.mxu0 0
        %906 = vmatmul.mubr.bf16.gmra.mrb[0].mxu0 %v528
        %v907 = vpop.f32.mrb[0].mxu0
        %v908 = vadd.f32 %v352, %v907
        %v909 = vpop.f32.mrb[0].mxu0
        %v910 = vadd.f32 %v356, %v909
        %v911 = vpop.f32.mrb[0].mxu0
        %v912 = vadd.f32 %v352, %v911
        %v913 = vpop.f32.mrb[0].mxu0
        %v914 = vadd.f32 %v356, %v913
        %915 = vdwg.mxu0
        %v916 = vmax.f32 %v565, 0.0
        %v917 = vmax.f32 %v567, 0.0
        %v918 = vmax.f32 %v758, 0.0
        %v919 = vmax.f32 %v760, 0.0
        %v920 = vmax.f32 %v569, 0.0
        %v921 = vmax.f32 %v571, 0.0
        %v922 = vmax.f32 %v762, 0.0
        %v923 = vmax.f32 %v764, 0.0
        %v924 = vmax.f32 %v575, 0.0
        %v925 = vmax.f32 %v577, 0.0
        %v926 = vmax.f32 %v768, 0.0
        %v927 = vmax.f32 %v770, 0.0
        %v928 = vmax.f32 %v579, 0.0
        %v929 = vmax.f32 %v581, 0.0
        %v930 = vmax.f32 %v772, 0.0
        %v931 = vmax.f32 %v774, 0.0
        %v932 = vmax.f32 %v585, 0.0
        %v933 = vmax.f32 %v587, 0.0
        %v934 = vmax.f32 %v778, 0.0
        %v935 = vmax.f32 %v780, 0.0
        %v936 = vmax.f32 %v589, 0.0
        %v937 = vmax.f32 %v591, 0.0
        %v938 = vmax.f32 %v782, 0.0
        %v939 = vmax.f32 %v784, 0.0
        %v940 = vmax.f32 %v595, 0.0
        %v941 = vmax.f32 %v597, 0.0
        %v942 = vmax.f32 %v788, 0.0
        %v943 = vmax.f32 %v790, 0.0
        %v944 = vmax.f32 %v599, 0.0
        %v945 = vmax.f32 %v601, 0.0
        %v946 = vmax.f32 %v792, 0.0
        %v947 = vmax.f32 %v794, 0.0
        %v948 = vmax.f32 %v605, 0.0
        %v949 = vmax.f32 %v607, 0.0
        %v950 = vmax.f32 %v798, 0.0
        %v951 = vmax.f32 %v800, 0.0
        %v952 = vmax.f32 %v609, 0.0
        %v953 = vmax.f32 %v611, 0.0
        %v954 = vmax.f32 %v802, 0.0
        %v955 = vmax.f32 %v804, 0.0
        %v956 = vmax.f32 %v615, 0.0
        %v957 = vmax.f32 %v617, 0.0
        %v958 = vmax.f32 %v808, 0.0
        %v959 = vmax.f32 %v810, 0.0
        %v960 = vmax.f32 %v619, 0.0
        %v961 = vmax.f32 %v621, 0.0
        %v962 = vmax.f32 %v812, 0.0
        %v963 = vmax.f32 %v814, 0.0
        %v964 = vmax.f32 %v625, 0.0
        %v965 = vmax.f32 %v627, 0.0
        %v966 = vmax.f32 %v818, 0.0
        %v967 = vmax.f32 %v820, 0.0
        %v968 = vmax.f32 %v629, 0.0
        %v969 = vmax.f32 %v631, 0.0
        %v970 = vmax.f32 %v822, 0.0
        %v971 = vmax.f32 %v824, 0.0
        %v972 = vmax.f32 %v635, 0.0
        %v973 = vmax.f32 %v637, 0.0
        %v974 = vmax.f32 %v828, 0.0
        %v975 = vmax.f32 %v830, 0.0
        %v976 = vmax.f32 %v639, 0.0
        %v977 = vmax.f32 %v641, 0.0
        %v978 = vmax.f32 %v832, 0.0
        %v979 = vmax.f32 %v834, 0.0
        %v980 = vmax.f32 %v645, 0.0
        %v981 = vmax.f32 %v647, 0.0
        %v982 = vmax.f32 %v838, 0.0
        %v983 = vmax.f32 %v840, 0.0
        %v984 = vmax.f32 %v649, 0.0
        %v985 = vmax.f32 %v651, 0.0
        %v986 = vmax.f32 %v842, 0.0
        %v987 = vmax.f32 %v844, 0.0
        %v988 = vmax.f32 %v655, 0.0
        %v989 = vmax.f32 %v657, 0.0
        %v990 = vmax.f32 %v848, 0.0
        %v991 = vmax.f32 %v850, 0.0
        %v992 = vmax.f32 %v659, 0.0
        %v993 = vmax.f32 %v661, 0.0
        %v994 = vmax.f32 %v852, 0.0
        %v995 = vmax.f32 %v854, 0.0
        %v996 = vmax.f32 %v665, 0.0
        %v997 = vmax.f32 %v667, 0.0
        %v998 = vmax.f32 %v858, 0.0
        %v999 = vmax.f32 %v860, 0.0
        %v1000 = vmax.f32 %v669, 0.0
        %v1001 = vmax.f32 %v671, 0.0
        %v1002 = vmax.f32 %v862, 0.0
        %v1003 = vmax.f32 %v864, 0.0
        %v1004 = vmax.f32 %v675, 0.0
        %v1005 = vmax.f32 %v677, 0.0
        %v1006 = vmax.f32 %v868, 0.0
        %v1007 = vmax.f32 %v870, 0.0
        %v1008 = vmax.f32 %v679, 0.0
        %v1009 = vmax.f32 %v681, 0.0
        %v1010 = vmax.f32 %v872, 0.0
        %v1011 = vmax.f32 %v874, 0.0
        %v1012 = vmax.f32 %v685, 0.0
        %v1013 = vmax.f32 %v687, 0.0
        %v1014 = vmax.f32 %v878, 0.0
        %v1015 = vmax.f32 %v880, 0.0
        %v1016 = vmax.f32 %v689, 0.0
        %v1017 = vmax.f32 %v691, 0.0
        %v1018 = vmax.f32 %v882, 0.0
        %v1019 = vmax.f32 %v884, 0.0
        %v1020 = vmax.f32 %v695, 0.0
        %v1021 = vmax.f32 %v697, 0.0
        %v1022 = vmax.f32 %v888, 0.0
        %v1023 = vmax.f32 %v890, 0.0
        %v1024 = vmax.f32 %v699, 0.0
        %v1025 = vmax.f32 %v701, 0.0
        %v1026 = vmax.f32 %v892, 0.0
        %v1027 = vmax.f32 %v894, 0.0
        %v1028 = vmax.f32 %v705, 0.0
        %v1029 = vmax.f32 %v707, 0.0
        %v1030 = vmax.f32 %v898, 0.0
        %v1031 = vmax.f32 %v900, 0.0
        %v1032 = vmax.f32 %v709, 0.0
        %v1033 = vmax.f32 %v711, 0.0
        %v1034 = vmax.f32 %v902, 0.0
        %v1035 = vmax.f32 %v904, 0.0
        %v1036 = vmax.f32 %v715, 0.0
        %v1037 = vmax.f32 %v717, 0.0
        %v1038 = vmax.f32 %v908, 0.0
        %v1039 = vmax.f32 %v910, 0.0
        %v1040 = vmax.f32 %v719, 0.0
        %v1041 = vmax.f32 %v721, 0.0
        %v1042 = vmax.f32 %v912, 0.0
        %v1043 = vmax.f32 %v914, 0.0
        %v1044 = vld [vmem:[%s287] sm:$0xf]
        %1045 = vmatprep.subr.mxu0 %v917
        %1046 = vmatpush1.msra.mxu0 %v916
        %1047 = vmatprep.subr.mxu0 %v921
        %1048 = vmatpush1.msra.mxu0 %v920
        %1049 = vmatprep.subr.mxu0 %v925
        %1050 = vmatpush1.msra.mxu0 %v924
        %1051 = vmatprep.subr.mxu0 %v929
        %1052 = vmatpush1.msra.mxu0 %v928
        %1053 = vmatprep.subr.mxu0 %v933
        %1054 = vmatpush1.msra.mxu0 %v932
        %1055 = vmatprep.subr.mxu0 %v937
        %1056 = vmatpush1.msra.mxu0 %v936
        %1057 = vmatprep.subr.mxu0 %v941
        %1058 = vmatpush1.msra.mxu0 %v940
        %1059 = vmatprep.subr.mxu0 %v945
        %1060 = vmatpush1.msra.mxu0 %v944
        %1061 = vmatprep.subr.mxu0 %v949
        %1062 = vmatpush1.msra.mxu0 %v948
        %1063 = vmatprep.subr.mxu0 %v953
        %1064 = vmatpush1.msra.mxu0 %v952
        %1065 = vmatprep.subr.mxu0 %v957
        %1066 = vmatpush1.msra.mxu0 %v956
        %1067 = vmatprep.subr.mxu0 %v961
        %1068 = vmatpush1.msra.mxu0 %v960
        %1069 = vmatprep.subr.mxu0 %v965
        %1070 = vmatpush1.msra.mxu0 %v964
        %1071 = vmatprep.subr.mxu0 %v969
        %1072 = vmatpush1.msra.mxu0 %v968
        %1073 = vmatprep.subr.mxu0 %v973
        %1074 = vmatpush1.msra.mxu0 %v972
        %1075 = vmatprep.subr.mxu0 %v977
        %1076 = vmatpush1.msra.mxu0 %v976
        %1077 = vmatprep.subr.mxu0 %v981
        %1078 = vmatpush1.msra.mxu0 %v980
        %1079 = vmatprep.subr.mxu0 %v985
        %1080 = vmatpush1.msra.mxu0 %v984
        %1081 = vmatprep.subr.mxu0 %v989
        %1082 = vmatpush1.msra.mxu0 %v988
        %1083 = vmatprep.subr.mxu0 %v993
        %1084 = vmatpush1.msra.mxu0 %v992
        %1085 = vmatprep.subr.mxu0 %v997
        %1086 = vmatpush1.msra.mxu0 %v996
        %1087 = vmatprep.subr.mxu0 %v1001
        %1088 = vmatpush1.msra.mxu0 %v1000
        %1089 = vmatprep.subr.mxu0 %v1005
        %1090 = vmatpush1.msra.mxu0 %v1004
        %1091 = vmatprep.subr.mxu0 %v1009
        %1092 = vmatpush1.msra.mxu0 %v1008
        %1093 = vmatprep.subr.mxu0 %v1013
        %1094 = vmatpush1.msra.mxu0 %v1012
        %1095 = vmatprep.subr.mxu0 %v1017
        %1096 = vmatpush1.msra.mxu0 %v1016
        %1097 = vmatprep.subr.mxu0 %v1021
        %1098 = vmatpush1.msra.mxu0 %v1020
        %1099 = vmatprep.subr.mxu0 %v1025
        %1100 = vmatpush1.msra.mxu0 %v1024
        %1101 = vmatprep.subr.mxu0 %v1029
        %1102 = vmatpush1.msra.mxu0 %v1028
        %1103 = vmatprep.subr.mxu0 %v1033
        %1104 = vmatpush1.msra.mxu0 %v1032
        %1105 = vmatprep.subr.mxu0 %v1037
        %1106 = vmatpush1.msra.mxu0 %v1036
        %1107 = vmatprep.subr.mxu0 %v1041
        %1108 = vmatpush1.msra.mxu0 %v1040
        %1109 = vmatprep.mubr.f32.mxu0 1.0
        %1110 = vmatmul.mubr.f32.gmra.mrb[0].mxu0 1.0
        %v1111 = vpop.f32.mrb[0].mxu0
        %v1112 = vadd.f32 0.0, %v1111
        %v1113 = vpop.f32.mrb[0].mxu0
        %v1114 = vadd.f32 0.0, %v1113
        %1115 = vdwg.mxu0
        %1116 = vmatprep.subr.mxu0 %v919
        %1117 = vmatpush1.msra.mxu0 %v918
        %1118 = vmatprep.subr.mxu0 %v923
        %1119 = vmatpush1.msra.mxu0 %v922
        %1120 = vmatprep.subr.mxu0 %v927
        %1121 = vmatpush1.msra.mxu0 %v926
        %1122 = vmatprep.subr.mxu0 %v931
        %1123 = vmatpush1.msra.mxu0 %v930
        %1124 = vmatprep.subr.mxu0 %v935
        %1125 = vmatpush1.msra.mxu0 %v934
        %1126 = vmatprep.subr.mxu0 %v939
        %1127 = vmatpush1.msra.mxu0 %v938
        %1128 = vmatprep.subr.mxu0 %v943
        %1129 = vmatpush1.msra.mxu0 %v942
        %1130 = vmatprep.subr.mxu0 %v947
        %1131 = vmatpush1.msra.mxu0 %v946
        %1132 = vmatprep.subr.mxu0 %v951
        %1133 = vmatpush1.msra.mxu0 %v950
        %1134 = vmatprep.subr.mxu0 %v955
        %1135 = vmatpush1.msra.mxu0 %v954
        %1136 = vmatprep.subr.mxu0 %v959
        %1137 = vmatpush1.msra.mxu0 %v958
        %1138 = vmatprep.subr.mxu0 %v963
        %1139 = vmatpush1.msra.mxu0 %v962
        %1140 = vmatprep.subr.mxu0 %v967
        %1141 = vmatpush1.msra.mxu0 %v966
        %1142 = vmatprep.subr.mxu0 %v971
        %1143 = vmatpush1.msra.mxu0 %v970
        %1144 = vmatprep.subr.mxu0 %v975
        %1145 = vmatpush1.msra.mxu0 %v974
        %1146 = vmatprep.subr.mxu0 %v979
        %1147 = vmatpush1.msra.mxu0 %v978
        %1148 = vmatprep.subr.mxu0 %v983
        %1149 = vmatpush1.msra.mxu0 %v982
        %1150 = vmatprep.subr.mxu0 %v987
        %1151 = vmatpush1.msra.mxu0 %v986
        %1152 = vmatprep.subr.mxu0 %v991
        %1153 = vmatpush1.msra.mxu0 %v990
        %1154 = vmatprep.subr.mxu0 %v995
        %1155 = vmatpush1.msra.mxu0 %v994
        %1156 = vmatprep.subr.mxu0 %v999
        %1157 = vmatpush1.msra.mxu0 %v998
        %1158 = vmatprep.subr.mxu0 %v1003
        %1159 = vmatpush1.msra.mxu0 %v1002
        %1160 = vmatprep.subr.mxu0 %v1007
        %1161 = vmatpush1.msra.mxu0 %v1006
        %1162 = vmatprep.subr.mxu0 %v1011
        %1163 = vmatpush1.msra.mxu0 %v1010
        %1164 = vmatprep.subr.mxu0 %v1015
        %1165 = vmatpush1.msra.mxu0 %v1014
        %1166 = vmatprep.subr.mxu0 %v1019
        %1167 = vmatpush1.msra.mxu0 %v1018
        %1168 = vmatprep.subr.mxu0 %v1023
        %1169 = vmatpush1.msra.mxu0 %v1022
        %1170 = vmatprep.subr.mxu0 %v1027
        %1171 = vmatpush1.msra.mxu0 %v1026
        %1172 = vmatprep.subr.mxu0 %v1031
        %1173 = vmatpush1.msra.mxu0 %v1030
        %1174 = vmatprep.subr.mxu0 %v1035
        %1175 = vmatpush1.msra.mxu0 %v1034
        %1176 = vmatprep.subr.mxu0 %v1039
        %1177 = vmatpush1.msra.mxu0 %v1038
        %1178 = vmatprep.subr.mxu0 %v1043
        %1179 = vmatpush1.msra.mxu0 %v1042
        %1180 = vmatprep.mubr.f32.mxu0 1.0
        %1181 = vmatmul.mubr.f32.gmra.mrb[0].mxu0 1.0
        %v1182 = vpop.f32.mrb[0].mxu0
        %v1183 = vadd.f32 0.0, %v1182
        %v1184 = vpop.f32.mrb[0].mxu0
        %v1185 = vadd.f32 0.0, %v1184
        %1186 = vdwg.mxu0
        %v1191 = vcombine.low %v1112, %v1114
        %v1192 = vcombine.low %v1183, %v1185
        %v1194 = vunpack.c.l.s4 1966171168
        %v1195 = vunpack.c.0.s8 %v1194
        %v1196 = vlaneseq
        %v1197 = vshrl.u32 %v1196, 7
        %v1198 = vsub.s32 %v1195, %v1197
        %v1199 = vrot.slane %v1191, %v1198
        %v1201 = vunpack.c.l.s4 1966171168
        %v1202 = vunpack.c.0.s8 %v1201
        %v1203 = vlaneseq
        %v1204 = vshrl.u32 %v1203, 7
        %v1205 = vsub.s32 %v1202, %v1204
        %v1206 = vrot.slane %v1192, %v1205
        %v1207 = vcombine.low %v1199, %v1206
        %v1209 = vunpack.c.l.s4 1966171168
        %v1210 = vunpack.c.0.s8 %v1209
        %v1211 = vlaneseq
        %v1212 = vshrl.u32 %v1211, 7
        %v1213 = vsub.s32 %v1210, %v1212
        %v1214 = vrot.slane %v1207, %v1213
        %v1216 = vadd.f32 %v1044, %v1214
        %v1217 = vlaneseq
        %vm1218 = vcmp.ge.s32.totalorder %v1217, 0
        %vm1219 = vcmp.lt.s32.totalorder %v1217, 512
        %vm1220 = vmand %vm1218, %vm1219
        %1221 = vst.msk [vmem:[%s287] sm:$0xf] %vm1220, %v1216
        // Predicated region
        $region60: #{cnn_forward.2} parent=50 // pred_check
          %p1222 = pneg %p290
        $region61: #{cnn_forward.2} parent=50 // pred_check_branch
          %1224 = sbr.rel (%p1222) target = $region63
        $region62: #{cnn_forward.2} parent=50 // pred_region
          %v1225 = vld [vmem:[%s287] sm:$0xf]
          %v1226 = vmul.f32 %v1225, 0.00390625
          %1227 = vst.msk [vmem:[%s287] sm:$0xf] %vm1220, %v1226
        $region63: #{cnn_forward.2} parent=50 // pred_fallthru
          _
        %s1228 = smul.u32 4, %s20
        %p1229 = scmp.lt.s32.totalorder %s19, 1
        %s1230 = scalar_select %p1229, %s19, 1
        %p1231 = scmp.lt.s32.totalorder %s1228, 15
        %s1232 = scalar_select %p1231, %s1228, 15
        %s1233 = smul.addr %s1230, 16
        %s1234 = sadd.s32 %s1232, %s1233
        %s1235 = scalar_lea.vmem %s3, %s1234
        // Predicated region
        $region64: #{cnn_forward.2} parent=50 // pred_check
          %p1236 = pneg %p133
        $region65: #{cnn_forward.2} parent=50 // pred_check_branch
          %1238 = sbr.rel (%p1236) target = $region67
        $region66: #{cnn_forward.2} parent=50 // pred_region
          %s1239 = smul.u32 4, %s20
        $region67: #{cnn_forward.2} parent=50 // pred_fallthru
          _
      $region51: #{cnn_forward.2} parent=5 // pred_fallthru
        _
      %p1240 = scmp.le.s32.totalorder 2, %s9
      // Predicated region
      $region68: #{cnn_forward.2} parent=5 // pred_check
        %p1241 = pneg %p1240
      $region69: #{cnn_forward.2} parent=5 // pred_check_branch
        %1243 = sbr.rel (%p1241) target = $region71
      $region70: #{cnn_forward.2} parent=5 // pred_region
        %s1244 = ssub.s32 %s9, 2
        // Predicated region
        $region72: #{cnn_forward.2} parent=70 // pred_check
          %p1245 = pneg %p139
        $region73: #{cnn_forward.2} parent=70 // pred_check_branch
          %1247 = sbr.rel (%p1245) target = $region75
        $region74: #{cnn_forward.2} parent=70 // pred_region
          %s1248 = smul.u32 4, %s23
          %p1249 = scmp.lt.s32.totalorder %s22, 1
          %s1250 = scalar_select %p1249, %s22, 1
          %p1251 = scmp.lt.s32.totalorder %s1248, 15
          %s1252 = scalar_select %p1251, %s1248, 15
          %s1253 = smul.addr %s1250, 16
          %s1254 = sadd.s32 %s1252, %s1253
          %s1255 = scalar_lea.vmem %s3, %s1254
        $region75: #{cnn_forward.2} parent=70 // pred_fallthru
          _
      $region71: #{cnn_forward.2} parent=5 // pred_fallthru
        _
    $region6: #{cnn_forward.2} parent=1 // loop_footer
      %s13 = sadd.s32 1, %s9
    $region7: #{cnn_forward.2} parent=1 // loop_footer_branch
      %8 = sbr.rel target = $region3
    $region8: #{cnn_forward.2} parent=1 // loop_exit
      _

// kernel: cnn_forward.3
$region0: #{cnn_forward.3}
  #allocation0 [shape = 'u32[]', space=smem, size = 0x4, offset = 0x4, fixed_abs, tag = 'smem constant byte address 0x4 - core index']
  #allocation1 [shape = 'u32[144,128]{1,0:T(1,128)}', space=vmem, size = 0x12000, scoped, tag = 'internal scratch']
  %s0 = inlined_call_operand.vmem [shape: f32[2,2048], index: 0, kind: input, shape index: {}]
  %s1 = inlined_call_operand.vmem [shape: bf16[2048,128], index: 1, kind: input, shape index: {}]
  %s2 = inlined_call_operand.vmem [shape: f32[1,128], index: 2, kind: input, shape index: {}]
  %s3 = inlined_call_operand.vmem [shape: f32[128,128], index: 3, kind: input, shape index: {}]
  %s4 = inlined_call_operand.vmem [shape: f32[1,128], index: 4, kind: input, shape index: {}]
  %s5 = inlined_call_operand.vmem [shape: f32[2,128], index: 5, kind: output, shape index: {}]
  %s6 = sld [smem:[#allocation0]]
  $region30: #{cnn_forward.3} parent=0
    _
  %s8 = ssub.s32 1, %s6
  %s9 = scalar_select 0, %s8, %s6
  // Predicated region
  $region2: #{cnn_forward.3} parent=0 // pred_check
    _
  $region3: #{cnn_forward.3} parent=0 // pred_check_branch
    %11 = sbr.rel (0) target = $region5
  $region4: #{cnn_forward.3} parent=0 // pred_region
    _
  $region5: #{cnn_forward.3} parent=0 // pred_fallthru
    _
  // Predicated region
  $region6: #{cnn_forward.3} parent=0 // pred_check
    _
  $region7: #{cnn_forward.3} parent=0 // pred_check_branch
    %13 = sbr.rel (0) target = $region9
  $region8: #{cnn_forward.3} parent=0 // pred_region
    _
  $region9: #{cnn_forward.3} parent=0 // pred_fallthru
    _
  // Predicated region
  $region10: #{cnn_forward.3} parent=0 // pred_check
    _
  $region11: #{cnn_forward.3} parent=0 // pred_check_branch
    %15 = sbr.rel (0) target = $region13
  $region12: #{cnn_forward.3} parent=0 // pred_region
    _
  $region13: #{cnn_forward.3} parent=0 // pred_fallthru
    _
  // Predicated region
  $region14: #{cnn_forward.3} parent=0 // pred_check
    _
  $region15: #{cnn_forward.3} parent=0 // pred_check_branch
    %17 = sbr.rel (0) target = $region17
  $region16: #{cnn_forward.3} parent=0 // pred_region
    _
  $region17: #{cnn_forward.3} parent=0 // pred_fallthru
    _
  // Predicated region
  $region18: #{cnn_forward.3} parent=0 // pred_check
    _
  $region19: #{cnn_forward.3} parent=0 // pred_check_branch
    %19 = sbr.rel (0) target = $region21
  $region20: #{cnn_forward.3} parent=0 // pred_region
    _
  $region21: #{cnn_forward.3} parent=0 // pred_fallthru
    _
  %v21 = vld [vmem:[%s0] sm:$0xff]
  %v22 = vld [vmem:[%s0 + $0x8] sm:$0xff]
  %v23 = vld [vmem:[%s0 + $0x10] sm:$0xff]
  %v24 = vld [vmem:[%s0 + $0x18] sm:$0xff]
  %v29 = vcombine.high %v21, %v21
  %v31 = vunpack.c.l.s4 1983009808
  %v32 = vunpack.c.0.s8 %v31
  %v33 = vlaneseq
  %v34 = vshrl.u32 %v33, 7
  %v35 = vsub.s32 %v32, %v34
  %v36 = vrot.slane %v21, %v35
  %v38 = vunpack.c.l.s4 1983009808
  %v39 = vunpack.c.0.s8 %v38
  %v40 = vlaneseq
  %v41 = vshrl.u32 %v40, 7
  %v42 = vsub.s32 %v39, %v41
  %v43 = vrot.slane %v29, %v42
  %v44 = vcombine.high %v36, %v36
  %v45 = vcombine.high %v43, %v43
  %v46 = vcombine.high %v22, %v22
  %v48 = vunpack.c.l.s4 1983009808
  %v49 = vunpack.c.0.s8 %v48
  %v50 = vlaneseq
  %v51 = vshrl.u32 %v50, 7
  %v52 = vsub.s32 %v49, %v51
  %v53 = vrot.slane %v22, %v52
  %v55 = vunpack.c.l.s4 1983009808
  %v56 = vunpack.c.0.s8 %v55
  %v57 = vlaneseq
  %v58 = vshrl.u32 %v57, 7
  %v59 = vsub.s32 %v56, %v58
  %v60 = vrot.slane %v46, %v59
  %v61 = vcombine.high %v53, %v53
  %v62 = vcombine.high %v60, %v60
  %v63 = vcombine.high %v23, %v23
  %v65 = vunpack.c.l.s4 1983009808
  %v66 = vunpack.c.0.s8 %v65
  %v67 = vlaneseq
  %v68 = vshrl.u32 %v67, 7
  %v69 = vsub.s32 %v66, %v68
  %v70 = vrot.slane %v23, %v69
  %v72 = vunpack.c.l.s4 1983009808
  %v73 = vunpack.c.0.s8 %v72
  %v74 = vlaneseq
  %v75 = vshrl.u32 %v74, 7
  %v76 = vsub.s32 %v73, %v75
  %v77 = vrot.slane %v63, %v76
  %v78 = vcombine.high %v70, %v70
  %v79 = vcombine.high %v77, %v77
  %v80 = vcombine.high %v24, %v24
  %v82 = vunpack.c.l.s4 1983009808
  %v83 = vunpack.c.0.s8 %v82
  %v84 = vlaneseq
  %v85 = vshrl.u32 %v84, 7
  %v86 = vsub.s32 %v83, %v85
  %v87 = vrot.slane %v24, %v86
  %v89 = vunpack.c.l.s4 1983009808
  %v90 = vunpack.c.0.s8 %v89
  %v91 = vlaneseq
  %v92 = vshrl.u32 %v91, 7
  %v93 = vsub.s32 %v90, %v92
  %v94 = vrot.slane %v80, %v93
  %v95 = vcombine.high %v87, %v87
  %v96 = vcombine.high %v94, %v94
  %v113 = vpack.c.bf16 %v36, %v36
  %v114 = vpack.c.bf16 %v44, %v44
  %v115 = vpack.c.bf16 %v43, %v43
  %v116 = vpack.c.bf16 %v45, %v45
  %v117 = vpack.c.bf16 %v53, %v53
  %v118 = vpack.c.bf16 %v61, %v61
  %v119 = vpack.c.bf16 %v60, %v60
  %v120 = vpack.c.bf16 %v62, %v62
  %v121 = vpack.c.bf16 %v70, %v70
  %v122 = vpack.c.bf16 %v78, %v78
  %v123 = vpack.c.bf16 %v77, %v77
  %v124 = vpack.c.bf16 %v79, %v79
  %v125 = vpack.c.bf16 %v87, %v87
  %v126 = vpack.c.bf16 %v95, %v95
  %v127 = vpack.c.bf16 %v94, %v94
  %v128 = vpack.c.bf16 %v96, %v96
  %v129 = vld [vmem:[%s1] sm:$0xf]
  %v130 = vld [vmem:[%s1 + $0x4] sm:$0xf]
  %v131 = vld [vmem:[%s1 + $0x8] sm:$0xf]
  %v132 = vld [vmem:[%s1 + $0xc] sm:$0xf]
  %v133 = vld [vmem:[%s1 + $0x10] sm:$0xf]
  %v134 = vld [vmem:[%s1 + $0x14] sm:$0xf]
  %v135 = vld [vmem:[%s1 + $0x18] sm:$0xf]
  %v136 = vld [vmem:[%s1 + $0x1c] sm:$0xf]
  %v137 = vld [vmem:[%s1 + $0x20] sm:$0xf]
  %v138 = vld [vmem:[%s1 + $0x24] sm:$0xf]
  %v139 = vld [vmem:[%s1 + $0x28] sm:$0xf]
  %v140 = vld [vmem:[%s1 + $0x2c] sm:$0xf]
  %v141 = vld [vmem:[%s1 + $0x30] sm:$0xf]
  %v142 = vld [vmem:[%s1 + $0x34] sm:$0xf]
  %v143 = vld [vmem:[%s1 + $0x38] sm:$0xf]
  %v144 = vld [vmem:[%s1 + $0x3c] sm:$0xf]
  %v145 = vld [vmem:[%s1 + $0x40] sm:$0xf]
  %v146 = vld [vmem:[%s1 + $0x44] sm:$0xf]
  %v147 = vld [vmem:[%s1 + $0x48] sm:$0xf]
  %v148 = vld [vmem:[%s1 + $0x4c] sm:$0xf]
  %v149 = vld [vmem:[%s1 + $0x50] sm:$0xf]
  %v150 = vld [vmem:[%s1 + $0x54] sm:$0xf]
  %v151 = vld [vmem:[%s1 + $0x58] sm:$0xf]
  %v152 = vld [vmem:[%s1 + $0x5c] sm:$0xf]
  %v153 = vld [vmem:[%s1 + $0x60] sm:$0xf]
  %v154 = vld [vmem:[%s1 + $0x64] sm:$0xf]
  %v155 = vld [vmem:[%s1 + $0x68] sm:$0xf]
  %v156 = vld [vmem:[%s1 + $0x6c] sm:$0xf]
  %v157 = vld [vmem:[%s1 + $0x70] sm:$0xf]
  %v158 = vld [vmem:[%s1 + $0x74] sm:$0xf]
  %v159 = vld [vmem:[%s1 + $0x78] sm:$0xf]
  %v160 = vld [vmem:[%s1 + $0x7c] sm:$0xf]
  %v161 = vld [vmem:[%s1 + $0x80] sm:$0xf]
  %v162 = vld [vmem:[%s1 + $0x84] sm:$0xf]
  %v163 = vld [vmem:[%s1 + $0x88] sm:$0xf]
  %v164 = vld [vmem:[%s1 + $0x8c] sm:$0xf]
  %v165 = vld [vmem:[%s1 + $0x90] sm:$0xf]
  %v166 = vld [vmem:[%s1 + $0x94] sm:$0xf]
  %v167 = vld [vmem:[%s1 + $0x98] sm:$0xf]
  %v168 = vld [vmem:[%s1 + $0x9c] sm:$0xf]
  %v169 = vld [vmem:[%s1 + $0xa0] sm:$0xf]
  %v170 = vld [vmem:[%s1 + $0xa4] sm:$0xf]
  %v171 = vld [vmem:[%s1 + $0xa8] sm:$0xf]
  %v172 = vld [vmem:[%s1 + $0xac] sm:$0xf]
  %v173 = vld [vmem:[%s1 + $0xb0] sm:$0xf]
  %v174 = vld [vmem:[%s1 + $0xb4] sm:$0xf]
  %v175 = vld [vmem:[%s1 + $0xb8] sm:$0xf]
  %v176 = vld [vmem:[%s1 + $0xbc] sm:$0xf]
  %v177 = vld [vmem:[%s1 + $0xc0] sm:$0xf]
  %v178 = vld [vmem:[%s1 + $0xc4] sm:$0xf]
  %v179 = vld [vmem:[%s1 + $0xc8] sm:$0xf]
  %v180 = vld [vmem:[%s1 + $0xcc] sm:$0xf]
  %v181 = vld [vmem:[%s1 + $0xd0] sm:$0xf]
  %v182 = vld [vmem:[%s1 + $0xd4] sm:$0xf]
  %v183 = vld [vmem:[%s1 + $0xd8] sm:$0xf]
  %v184 = vld [vmem:[%s1 + $0xdc] sm:$0xf]
  %v185 = vld [vmem:[%s1 + $0xe0] sm:$0xf]
  %v186 = vld [vmem:[%s1 + $0xe4] sm:$0xf]
  %v187 = vld [vmem:[%s1 + $0xe8] sm:$0xf]
  %v188 = vld [vmem:[%s1 + $0xec] sm:$0xf]
  %v189 = vld [vmem:[%s1 + $0xf0] sm:$0xf]
  %v190 = vld [vmem:[%s1 + $0xf4] sm:$0xf]
  %v191 = vld [vmem:[%s1 + $0xf8] sm:$0xf]
  %v192 = vld [vmem:[%s1 + $0xfc] sm:$0xf]
  %v193 = vld [vmem:[%s1 + $0x100] sm:$0xf]
  %v194 = vld [vmem:[%s1 + $0x104] sm:$0xf]
  %v195 = vld [vmem:[%s1 + $0x108] sm:$0xf]
  %v196 = vld [vmem:[%s1 + $0x10c] sm:$0xf]
  %v197 = vld [vmem:[%s1 + $0x110] sm:$0xf]
  %v198 = vld [vmem:[%s1 + $0x114] sm:$0xf]
  %v199 = vld [vmem:[%s1 + $0x118] sm:$0xf]
  %v200 = vld [vmem:[%s1 + $0x11c] sm:$0xf]
  %v201 = vld [vmem:[%s1 + $0x120] sm:$0xf]
  %v202 = vld [vmem:[%s1 + $0x124] sm:$0xf]
  %v203 = vld [vmem:[%s1 + $0x128] sm:$0xf]
  %v204 = vld [vmem:[%s1 + $0x12c] sm:$0xf]
  %v205 = vld [vmem:[%s1 + $0x130] sm:$0xf]
  %v206 = vld [vmem:[%s1 + $0x134] sm:$0xf]
  %v207 = vld [vmem:[%s1 + $0x138] sm:$0xf]
  %v208 = vld [vmem:[%s1 + $0x13c] sm:$0xf]
  %v209 = vld [vmem:[%s1 + $0x140] sm:$0xf]
  %v210 = vld [vmem:[%s1 + $0x144] sm:$0xf]
  %v211 = vld [vmem:[%s1 + $0x148] sm:$0xf]
  %v212 = vld [vmem:[%s1 + $0x14c] sm:$0xf]
  %v213 = vld [vmem:[%s1 + $0x150] sm:$0xf]
  %v214 = vld [vmem:[%s1 + $0x154] sm:$0xf]
  %v215 = vld [vmem:[%s1 + $0x158] sm:$0xf]
  %v216 = vld [vmem:[%s1 + $0x15c] sm:$0xf]
  %v217 = vld [vmem:[%s1 + $0x160] sm:$0xf]
  %v218 = vld [vmem:[%s1 + $0x164] sm:$0xf]
  %v219 = vld [vmem:[%s1 + $0x168] sm:$0xf]
  %v220 = vld [vmem:[%s1 + $0x16c] sm:$0xf]
  %v221 = vld [vmem:[%s1 + $0x170] sm:$0xf]
  %v222 = vld [vmem:[%s1 + $0x174] sm:$0xf]
  %v223 = vld [vmem:[%s1 + $0x178] sm:$0xf]
  %v224 = vld [vmem:[%s1 + $0x17c] sm:$0xf]
  %v225 = vld [vmem:[%s1 + $0x180] sm:$0xf]
  %v226 = vld [vmem:[%s1 + $0x184] sm:$0xf]
  %v227 = vld [vmem:[%s1 + $0x188] sm:$0xf]
  %v228 = vld [vmem:[%s1 + $0x18c] sm:$0xf]
  %v229 = vld [vmem:[%s1 + $0x190] sm:$0xf]
  %v230 = vld [vmem:[%s1 + $0x194] sm:$0xf]
  %v231 = vld [vmem:[%s1 + $0x198] sm:$0xf]
  %v232 = vld [vmem:[%s1 + $0x19c] sm:$0xf]
  %v233 = vld [vmem:[%s1 + $0x1a0] sm:$0xf]
  %v234 = vld [vmem:[%s1 + $0x1a4] sm:$0xf]
  %v235 = vld [vmem:[%s1 + $0x1a8] sm:$0xf]
  %v236 = vld [vmem:[%s1 + $0x1ac] sm:$0xf]
  %v237 = vld [vmem:[%s1 + $0x1b0] sm:$0xf]
  %v238 = vld [vmem:[%s1 + $0x1b4] sm:$0xf]
  %v239 = vld [vmem:[%s1 + $0x1b8] sm:$0xf]
  %v240 = vld [vmem:[%s1 + $0x1bc] sm:$0xf]
  %v241 = vld [vmem:[%s1 + $0x1c0] sm:$0xf]
  %v242 = vld [vmem:[%s1 + $0x1c4] sm:$0xf]
  %v243 = vld [vmem:[%s1 + $0x1c8] sm:$0xf]
  %v244 = vld [vmem:[%s1 + $0x1cc] sm:$0xf]
  %v245 = vld [vmem:[%s1 + $0x1d0] sm:$0xf]
  %v246 = vld [vmem:[%s1 + $0x1d4] sm:$0xf]
  %v247 = vld [vmem:[%s1 + $0x1d8] sm:$0xf]
  %v248 = vld [vmem:[%s1 + $0x1dc] sm:$0xf]
  %v249 = vld [vmem:[%s1 + $0x1e0] sm:$0xf]
  %v250 = vld [vmem:[%s1 + $0x1e4] sm:$0xf]
  %v251 = vld [vmem:[%s1 + $0x1e8] sm:$0xf]
  %v252 = vld [vmem:[%s1 + $0x1ec] sm:$0xf]
  %v253 = vld [vmem:[%s1 + $0x1f0] sm:$0xf]
  %v254 = vld [vmem:[%s1 + $0x1f4] sm:$0xf]
  %v255 = vld [vmem:[%s1 + $0x1f8] sm:$0xf]
  %v256 = vld [vmem:[%s1 + $0x1fc] sm:$0xf]
  %v257 = vld [vmem:[%s1 + $0x200] sm:$0xf]
  %v258 = vld [vmem:[%s1 + $0x204] sm:$0xf]
  %v259 = vld [vmem:[%s1 + $0x208] sm:$0xf]
  %v260 = vld [vmem:[%s1 + $0x20c] sm:$0xf]
  %v261 = vld [vmem:[%s1 + $0x210] sm:$0xf]
  %v262 = vld [vmem:[%s1 + $0x214] sm:$0xf]
  %v263 = vld [vmem:[%s1 + $0x218] sm:$0xf]
  %v264 = vld [vmem:[%s1 + $0x21c] sm:$0xf]
  %v265 = vld [vmem:[%s1 + $0x220] sm:$0xf]
  %v266 = vld [vmem:[%s1 + $0x224] sm:$0xf]
  %v267 = vld [vmem:[%s1 + $0x228] sm:$0xf]
  %v268 = vld [vmem:[%s1 + $0x22c] sm:$0xf]
  %v269 = vld [vmem:[%s1 + $0x230] sm:$0xf]
  %v270 = vld [vmem:[%s1 + $0x234] sm:$0xf]
  %v271 = vld [vmem:[%s1 + $0x238] sm:$0xf]
  %v272 = vld [vmem:[%s1 + $0x23c] sm:$0xf]
  %v273 = vld [vmem:[%s1 + $0x240] sm:$0xf]
  %v274 = vld [vmem:[%s1 + $0x244] sm:$0xf]
  %v275 = vld [vmem:[%s1 + $0x248] sm:$0xf]
  %v276 = vld [vmem:[%s1 + $0x24c] sm:$0xf]
  %v277 = vld [vmem:[%s1 + $0x250] sm:$0xf]
  %v278 = vld [vmem:[%s1 + $0x254] sm:$0xf]
  %v279 = vld [vmem:[%s1 + $0x258] sm:$0xf]
  %v280 = vld [vmem:[%s1 + $0x25c] sm:$0xf]
  %v281 = vld [vmem:[%s1 + $0x260] sm:$0xf]
  %v282 = vld [vmem:[%s1 + $0x264] sm:$0xf]
  %v283 = vld [vmem:[%s1 + $0x268] sm:$0xf]
  %v284 = vld [vmem:[%s1 + $0x26c] sm:$0xf]
  %v285 = vld [vmem:[%s1 + $0x270] sm:$0xf]
  %v286 = vld [vmem:[%s1 + $0x274] sm:$0xf]
  %v287 = vld [vmem:[%s1 + $0x278] sm:$0xf]
  %v288 = vld [vmem:[%s1 + $0x27c] sm:$0xf]
  %v289 = vld [vmem:[%s1 + $0x280] sm:$0xf]
  %v290 = vld [vmem:[%s1 + $0x284] sm:$0xf]
  %v291 = vld [vmem:[%s1 + $0x288] sm:$0xf]
  %v292 = vld [vmem:[%s1 + $0x28c] sm:$0xf]
  %v293 = vld [vmem:[%s1 + $0x290] sm:$0xf]
  %v294 = vld [vmem:[%s1 + $0x294] sm:$0xf]
  %v295 = vld [vmem:[%s1 + $0x298] sm:$0xf]
  %v296 = vld [vmem:[%s1 + $0x29c] sm:$0xf]
  %v297 = vld [vmem:[%s1 + $0x2a0] sm:$0xf]
  %v298 = vld [vmem:[%s1 + $0x2a4] sm:$0xf]
  %v299 = vld [vmem:[%s1 + $0x2a8] sm:$0xf]
  %v300 = vld [vmem:[%s1 + $0x2ac] sm:$0xf]
  %v301 = vld [vmem:[%s1 + $0x2b0] sm:$0xf]
  %v302 = vld [vmem:[%s1 + $0x2b4] sm:$0xf]
  %v303 = vld [vmem:[%s1 + $0x2b8] sm:$0xf]
  %v304 = vld [vmem:[%s1 + $0x2bc] sm:$0xf]
  %v305 = vld [vmem:[%s1 + $0x2c0] sm:$0xf]
  %v306 = vld [vmem:[%s1 + $0x2c4] sm:$0xf]
  %v307 = vld [vmem:[%s1 + $0x2c8] sm:$0xf]
  %v308 = vld [vmem:[%s1 + $0x2cc] sm:$0xf]
  %v309 = vld [vmem:[%s1 + $0x2d0] sm:$0xf]
  %v310 = vld [vmem:[%s1 + $0x2d4] sm:$0xf]
  %v311 = vld [vmem:[%s1 + $0x2d8] sm:$0xf]
  %v312 = vld [vmem:[%s1 + $0x2dc] sm:$0xf]
  %v313 = vld [vmem:[%s1 + $0x2e0] sm:$0xf]
  %v314 = vld [vmem:[%s1 + $0x2e4] sm:$0xf]
  %v315 = vld [vmem:[%s1 + $0x2e8] sm:$0xf]
  %v316 = vld [vmem:[%s1 + $0x2ec] sm:$0xf]
  %v317 = vld [vmem:[%s1 + $0x2f0] sm:$0xf]
  %v318 = vld [vmem:[%s1 + $0x2f4] sm:$0xf]
  %v319 = vld [vmem:[%s1 + $0x2f8] sm:$0xf]
  %v320 = vld [vmem:[%s1 + $0x2fc] sm:$0xf]
  %v321 = vld [vmem:[%s1 + $0x300] sm:$0xf]
  %v322 = vld [vmem:[%s1 + $0x304] sm:$0xf]
  %v323 = vld [vmem:[%s1 + $0x308] sm:$0xf]
  %v324 = vld [vmem:[%s1 + $0x30c] sm:$0xf]
  %v325 = vld [vmem:[%s1 + $0x310] sm:$0xf]
  %v326 = vld [vmem:[%s1 + $0x314] sm:$0xf]
  %v327 = vld [vmem:[%s1 + $0x318] sm:$0xf]
  %v328 = vld [vmem:[%s1 + $0x31c] sm:$0xf]
  %v329 = vld [vmem:[%s1 + $0x320] sm:$0xf]
  %v330 = vld [vmem:[%s1 + $0x324] sm:$0xf]
  %v331 = vld [vmem:[%s1 + $0x328] sm:$0xf]
  %v332 = vld [vmem:[%s1 + $0x32c] sm:$0xf]
  %v333 = vld [vmem:[%s1 + $0x330] sm:$0xf]
  %v334 = vld [vmem:[%s1 + $0x334] sm:$0xf]
  %v335 = vld [vmem:[%s1 + $0x338] sm:$0xf]
  %v336 = vld [vmem:[%s1 + $0x33c] sm:$0xf]
  %v337 = vld [vmem:[%s1 + $0x340] sm:$0xf]
  %v338 = vld [vmem:[%s1 + $0x344] sm:$0xf]
  %v339 = vld [vmem:[%s1 + $0x348] sm:$0xf]
  %v340 = vld [vmem:[%s1 + $0x34c] sm:$0xf]
  %v341 = vld [vmem:[%s1 + $0x350] sm:$0xf]
  %v342 = vld [vmem:[%s1 + $0x354] sm:$0xf]
  %v343 = vld [vmem:[%s1 + $0x358] sm:$0xf]
  %v344 = vld [vmem:[%s1 + $0x35c] sm:$0xf]
  %v345 = vld [vmem:[%s1 + $0x360] sm:$0xf]
  %v346 = vld [vmem:[%s1 + $0x364] sm:$0xf]
  %v347 = vld [vmem:[%s1 + $0x368] sm:$0xf]
  %v348 = vld [vmem:[%s1 + $0x36c] sm:$0xf]
  %v349 = vld [vmem:[%s1 + $0x370] sm:$0xf]
  %v350 = vld [vmem:[%s1 + $0x374] sm:$0xf]
  %v351 = vld [vmem:[%s1 + $0x378] sm:$0xf]
  %v352 = vld [vmem:[%s1 + $0x37c] sm:$0xf]
  %v353 = vld [vmem:[%s1 + $0x380] sm:$0xf]
  %v354 = vld [vmem:[%s1 + $0x384] sm:$0xf]
  %v355 = vld [vmem:[%s1 + $0x388] sm:$0xf]
  %v356 = vld [vmem:[%s1 + $0x38c] sm:$0xf]
  %v357 = vld [vmem:[%s1 + $0x390] sm:$0xf]
  %v358 = vld [vmem:[%s1 + $0x394] sm:$0xf]
  %v359 = vld [vmem:[%s1 + $0x398] sm:$0xf]
  %v360 = vld [vmem:[%s1 + $0x39c] sm:$0xf]
  %v361 = vld [vmem:[%s1 + $0x3a0] sm:$0xf]
  %v362 = vld [vmem:[%s1 + $0x3a4] sm:$0xf]
  %v363 = vld [vmem:[%s1 + $0x3a8] sm:$0xf]
  %v364 = vld [vmem:[%s1 + $0x3ac] sm:$0xf]
  %v365 = vld [vmem:[%s1 + $0x3b0] sm:$0xf]
  %v366 = vld [vmem:[%s1 + $0x3b4] sm:$0xf]
  %v367 = vld [vmem:[%s1 + $0x3b8] sm:$0xf]
  %v368 = vld [vmem:[%s1 + $0x3bc] sm:$0xf]
  %v369 = vld [vmem:[%s1 + $0x3c0] sm:$0xf]
  %v370 = vld [vmem:[%s1 + $0x3c4] sm:$0xf]
  %v371 = vld [vmem:[%s1 + $0x3c8] sm:$0xf]
  %v372 = vld [vmem:[%s1 + $0x3cc] sm:$0xf]
  %v373 = vld [vmem:[%s1 + $0x3d0] sm:$0xf]
  %v374 = vld [vmem:[%s1 + $0x3d4] sm:$0xf]
  %v375 = vld [vmem:[%s1 + $0x3d8] sm:$0xf]
  %v376 = vld [vmem:[%s1 + $0x3dc] sm:$0xf]
  %v377 = vld [vmem:[%s1 + $0x3e0] sm:$0xf]
  %v378 = vld [vmem:[%s1 + $0x3e4] sm:$0xf]
  %v379 = vld [vmem:[%s1 + $0x3e8] sm:$0xf]
  %v380 = vld [vmem:[%s1 + $0x3ec] sm:$0xf]
  %v381 = vld [vmem:[%s1 + $0x3f0] sm:$0xf]
  %v382 = vld [vmem:[%s1 + $0x3f4] sm:$0xf]
  %v383 = vld [vmem:[%s1 + $0x3f8] sm:$0xf]
  %v384 = vld [vmem:[%s1 + $0x3fc] sm:$0xf]
  %v385 = vld [vmem:[%s2] sm:$0x1]
  %v387 = vlaneseq
  %v388 = vshrl.u32 %v387, 7
  %v389 = vsub.s32 0, %v388
  %v390 = vrot.slane %v385, %v389
  %v648 = vunpack.c.l.b16 %v129
  %v649 = vunpack.c.l.b16 %v130
  %v650 = vunpack.c.l.b16 %v131
  %v651 = vunpack.c.l.b16 %v132
  %v652 = vunpack.c.l.b16 %v133
  %v653 = vunpack.c.l.b16 %v134
  %v654 = vunpack.c.l.b16 %v135
  %v655 = vunpack.c.l.b16 %v136
  %v656 = vunpack.c.l.b16 %v137
  %v657 = vunpack.c.l.b16 %v138
  %v658 = vunpack.c.l.b16 %v139
  %v659 = vunpack.c.l.b16 %v140
  %v660 = vunpack.c.l.b16 %v141
  %v661 = vunpack.c.l.b16 %v142
  %v662 = vunpack.c.l.b16 %v143
  %v663 = vunpack.c.l.b16 %v144
  %v664 = vunpack.c.l.b16 %v145
  %v665 = vunpack.c.l.b16 %v146
  %v666 = vunpack.c.l.b16 %v147
  %v667 = vunpack.c.l.b16 %v148
  %v668 = vunpack.c.l.b16 %v149
  %v669 = vunpack.c.l.b16 %v150
  %v670 = vunpack.c.l.b16 %v151
  %v671 = vunpack.c.l.b16 %v152
  %v672 = vunpack.c.l.b16 %v153
  %v673 = vunpack.c.l.b16 %v154
  %v674 = vunpack.c.l.b16 %v155
  %v675 = vunpack.c.l.b16 %v156
  %v676 = vunpack.c.l.b16 %v157
  %v677 = vunpack.c.l.b16 %v158
  %v678 = vunpack.c.l.b16 %v159
  %v679 = vunpack.c.l.b16 %v160
  %v680 = vunpack.c.l.b16 %v161
  %v681 = vunpack.c.l.b16 %v162
  %v682 = vunpack.c.l.b16 %v163
  %v683 = vunpack.c.l.b16 %v164
  %v684 = vunpack.c.l.b16 %v165
  %v685 = vunpack.c.l.b16 %v166
  %v686 = vunpack.c.l.b16 %v167
  %v687 = vunpack.c.l.b16 %v168
  %v688 = vunpack.c.l.b16 %v169
  %v689 = vunpack.c.l.b16 %v170
  %v690 = vunpack.c.l.b16 %v171
  %v691 = vunpack.c.l.b16 %v172
  %v692 = vunpack.c.l.b16 %v173
  %v693 = vunpack.c.l.b16 %v174
  %v694 = vunpack.c.l.b16 %v175
  %v695 = vunpack.c.l.b16 %v176
  %v696 = vunpack.c.l.b16 %v177
  %v697 = vunpack.c.l.b16 %v178
  %v698 = vunpack.c.l.b16 %v179
  %v699 = vunpack.c.l.b16 %v180
  %v700 = vunpack.c.l.b16 %v181
  %v701 = vunpack.c.l.b16 %v182
  %v702 = vunpack.c.l.b16 %v183
  %v703 = vunpack.c.l.b16 %v184
  %v704 = vunpack.c.l.b16 %v185
  %v705 = vunpack.c.l.b16 %v186
  %v706 = vunpack.c.l.b16 %v187
  %v707 = vunpack.c.l.b16 %v188
  %v708 = vunpack.c.l.b16 %v189
  %v709 = vunpack.c.l.b16 %v190
  %v710 = vunpack.c.l.b16 %v191
  %v711 = vunpack.c.l.b16 %v192
  %v712 = vunpack.c.l.b16 %v193
  %v713 = vunpack.c.l.b16 %v194
  %v714 = vunpack.c.l.b16 %v195
  %v715 = vunpack.c.l.b16 %v196
  %v716 = vunpack.c.l.b16 %v197
  %v717 = vunpack.c.l.b16 %v198
  %v718 = vunpack.c.l.b16 %v199
  %v719 = vunpack.c.l.b16 %v200
  %v720 = vunpack.c.l.b16 %v201
  %v721 = vunpack.c.l.b16 %v202
  %v722 = vunpack.c.l.b16 %v203
  %v723 = vunpack.c.l.b16 %v204
  %v724 = vunpack.c.l.b16 %v205
  %v725 = vunpack.c.l.b16 %v206
  %v726 = vunpack.c.l.b16 %v207
  %v727 = vunpack.c.l.b16 %v208
  %v728 = vunpack.c.l.b16 %v209
  %v729 = vunpack.c.l.b16 %v210
  %v730 = vunpack.c.l.b16 %v211
  %v731 = vunpack.c.l.b16 %v212
  %v732 = vunpack.c.l.b16 %v213
  %v733 = vunpack.c.l.b16 %v214
  %v734 = vunpack.c.l.b16 %v215
  %v735 = vunpack.c.l.b16 %v216
  %v736 = vunpack.c.l.b16 %v217
  %v737 = vunpack.c.l.b16 %v218
  %v738 = vunpack.c.l.b16 %v219
  %v739 = vunpack.c.l.b16 %v220
  %v740 = vunpack.c.l.b16 %v221
  %v741 = vunpack.c.l.b16 %v222
  %v742 = vunpack.c.l.b16 %v223
  %v743 = vunpack.c.l.b16 %v224
  %v744 = vunpack.c.l.b16 %v225
  %v745 = vunpack.c.l.b16 %v226
  %v746 = vunpack.c.l.b16 %v227
  %v747 = vunpack.c.l.b16 %v228
  %v748 = vunpack.c.l.b16 %v229
  %v749 = vunpack.c.l.b16 %v230
  %v750 = vunpack.c.l.b16 %v231
  %v751 = vunpack.c.l.b16 %v232
  %v752 = vunpack.c.l.b16 %v233
  %v753 = vunpack.c.l.b16 %v234
  %v754 = vunpack.c.l.b16 %v235
  %v755 = vunpack.c.l.b16 %v236
  %v756 = vunpack.c.l.b16 %v237
  %v757 = vunpack.c.l.b16 %v238
  %v758 = vunpack.c.l.b16 %v239
  %v759 = vunpack.c.l.b16 %v240
  %v760 = vunpack.c.l.b16 %v241
  %v761 = vunpack.c.l.b16 %v242
  %v762 = vunpack.c.l.b16 %v243
  %v763 = vunpack.c.l.b16 %v244
  %v764 = vunpack.c.l.b16 %v245
  %v765 = vunpack.c.l.b16 %v246
  %v766 = vunpack.c.l.b16 %v247
  %v767 = vunpack.c.l.b16 %v248
  %v768 = vunpack.c.l.b16 %v249
  %v769 = vunpack.c.l.b16 %v250
  %v770 = vunpack.c.l.b16 %v251
  %v771 = vunpack.c.l.b16 %v252
  %v772 = vunpack.c.l.b16 %v253
  %v773 = vunpack.c.l.b16 %v254
  %v774 = vunpack.c.l.b16 %v255
  %v775 = vunpack.c.l.b16 %v256
  %v776 = vunpack.c.l.b16 %v257
  %v777 = vunpack.c.l.b16 %v258
  %v778 = vunpack.c.l.b16 %v259
  %v779 = vunpack.c.l.b16 %v260
  %v780 = vunpack.c.l.b16 %v261
  %v781 = vunpack.c.l.b16 %v262
  %v782 = vunpack.c.l.b16 %v263
  %v783 = vunpack.c.l.b16 %v264
  %v784 = vunpack.c.l.b16 %v265
  %v785 = vunpack.c.l.b16 %v266
  %v786 = vunpack.c.l.b16 %v267
  %v787 = vunpack.c.l.b16 %v268
  %v788 = vunpack.c.l.b16 %v269
  %v789 = vunpack.c.l.b16 %v270
  %v790 = vunpack.c.l.b16 %v271
  %v791 = vunpack.c.l.b16 %v272
  %v792 = vunpack.c.l.b16 %v273
  %v793 = vunpack.c.l.b16 %v274
  %v794 = vunpack.c.l.b16 %v275
  %v795 = vunpack.c.l.b16 %v276
  %v796 = vunpack.c.l.b16 %v277
  %v797 = vunpack.c.l.b16 %v278
  %v798 = vunpack.c.l.b16 %v279
  %v799 = vunpack.c.l.b16 %v280
  %v800 = vunpack.c.l.b16 %v281
  %v801 = vunpack.c.l.b16 %v282
  %v802 = vunpack.c.l.b16 %v283
  %v803 = vunpack.c.l.b16 %v284
  %v804 = vunpack.c.l.b16 %v285
  %v805 = vunpack.c.l.b16 %v286
  %v806 = vunpack.c.l.b16 %v287
  %v807 = vunpack.c.l.b16 %v288
  %v808 = vunpack.c.l.b16 %v289
  %v809 = vunpack.c.l.b16 %v290
  %v810 = vunpack.c.l.b16 %v291
  %v811 = vunpack.c.l.b16 %v292
  %v812 = vunpack.c.l.b16 %v293
  %v813 = vunpack.c.l.b16 %v294
  %v814 = vunpack.c.l.b16 %v295
  %v815 = vunpack.c.l.b16 %v296
  %v816 = vunpack.c.l.b16 %v297
  %v817 = vunpack.c.l.b16 %v298
  %v818 = vunpack.c.l.b16 %v299
  %v819 = vunpack.c.l.b16 %v300
  %v820 = vunpack.c.l.b16 %v301
  %v821 = vunpack.c.l.b16 %v302
  %v822 = vunpack.c.l.b16 %v303
  %v823 = vunpack.c.l.b16 %v304
  %v824 = vunpack.c.l.b16 %v305
  %v825 = vunpack.c.l.b16 %v306
  %v826 = vunpack.c.l.b16 %v307
  %v827 = vunpack.c.l.b16 %v308
  %v828 = vunpack.c.l.b16 %v309
  %v829 = vunpack.c.l.b16 %v310
  %v830 = vunpack.c.l.b16 %v311
  %v831 = vunpack.c.l.b16 %v312
  %v832 = vunpack.c.l.b16 %v313
  %v833 = vunpack.c.l.b16 %v314
  %v834 = vunpack.c.l.b16 %v315
  %v835 = vunpack.c.l.b16 %v316
  %v836 = vunpack.c.l.b16 %v317
  %v837 = vunpack.c.l.b16 %v318
  %v838 = vunpack.c.l.b16 %v319
  %v839 = vunpack.c.l.b16 %v320
  %v840 = vunpack.c.l.b16 %v321
  %v841 = vunpack.c.l.b16 %v322
  %v842 = vunpack.c.l.b16 %v323
  %v843 = vunpack.c.l.b16 %v324
  %v844 = vunpack.c.l.b16 %v325
  %v845 = vunpack.c.l.b16 %v326
  %v846 = vunpack.c.l.b16 %v327
  %v847 = vunpack.c.l.b16 %v328
  %v848 = vunpack.c.l.b16 %v329
  %v849 = vunpack.c.l.b16 %v330
  %v850 = vunpack.c.l.b16 %v331
  %v851 = vunpack.c.l.b16 %v332
  %v852 = vunpack.c.l.b16 %v333
  %v853 = vunpack.c.l.b16 %v334
  %v854 = vunpack.c.l.b16 %v335
  %v855 = vunpack.c.l.b16 %v336
  %v856 = vunpack.c.l.b16 %v337
  %v857 = vunpack.c.l.b16 %v338
  %v858 = vunpack.c.l.b16 %v339
  %v859 = vunpack.c.l.b16 %v340
  %v860 = vunpack.c.l.b16 %v341
  %v861 = vunpack.c.l.b16 %v342
  %v862 = vunpack.c.l.b16 %v343
  %v863 = vunpack.c.l.b16 %v344
  %v864 = vunpack.c.l.b16 %v345
  %v865 = vunpack.c.l.b16 %v346
  %v866 = vunpack.c.l.b16 %v347
  %v867 = vunpack.c.l.b16 %v348
  %v868 = vunpack.c.l.b16 %v349
  %v869 = vunpack.c.l.b16 %v350
  %v870 = vunpack.c.l.b16 %v351
  %v871 = vunpack.c.l.b16 %v352
  %v872 = vunpack.c.l.b16 %v353
  %v873 = vunpack.c.l.b16 %v354
  %v874 = vunpack.c.l.b16 %v355
  %v875 = vunpack.c.l.b16 %v356
  %v876 = vunpack.c.l.b16 %v357
  %v877 = vunpack.c.l.b16 %v358
  %v878 = vunpack.c.l.b16 %v359
  %v879 = vunpack.c.l.b16 %v360
  %v880 = vunpack.c.l.b16 %v361
  %v881 = vunpack.c.l.b16 %v362
  %v882 = vunpack.c.l.b16 %v363
  %v883 = vunpack.c.l.b16 %v364
  %v884 = vunpack.c.l.b16 %v365
  %v885 = vunpack.c.l.b16 %v366
  %v886 = vunpack.c.l.b16 %v367
  %v887 = vunpack.c.l.b16 %v368
  %v888 = vunpack.c.l.b16 %v369
  %v889 = vunpack.c.l.b16 %v370
  %v890 = vunpack.c.l.b16 %v371
  %v891 = vunpack.c.l.b16 %v372
  %v892 = vunpack.c.l.b16 %v373
  %v893 = vunpack.c.l.b16 %v374
  %v894 = vunpack.c.l.b16 %v375
  %v895 = vunpack.c.l.b16 %v376
  %v896 = vunpack.c.l.b16 %v377
  %v897 = vunpack.c.l.b16 %v378
  %v898 = vunpack.c.l.b16 %v379
  %v899 = vunpack.c.l.b16 %v380
  %v900 = vunpack.c.l.b16 %v381
  %v901 = vunpack.c.l.b16 %v382
  %v902 = vunpack.c.l.b16 %v383
  %v903 = vunpack.c.l.b16 %v384
  %v904 = vpack.c.b16 %v649, %v648
  %v905 = vpack.c.b16 %v651, %v650
  %v906 = vpack.c.b16 %v653, %v652
  %v907 = vpack.c.b16 %v655, %v654
  %v908 = vpack.c.b16 %v657, %v656
  %v909 = vpack.c.b16 %v659, %v658
  %v910 = vpack.c.b16 %v661, %v660
  %v911 = vpack.c.b16 %v663, %v662
  %v912 = vpack.c.b16 %v665, %v664
  %v913 = vpack.c.b16 %v667, %v666
  %v914 = vpack.c.b16 %v669, %v668
  %v915 = vpack.c.b16 %v671, %v670
  %v916 = vpack.c.b16 %v673, %v672
  %v917 = vpack.c.b16 %v675, %v674
  %v918 = vpack.c.b16 %v677, %v676
  %v919 = vpack.c.b16 %v679, %v678
  %v920 = vpack.c.b16 %v681, %v680
  %v921 = vpack.c.b16 %v683, %v682
  %v922 = vpack.c.b16 %v685, %v684
  %v923 = vpack.c.b16 %v687, %v686
  %v924 = vpack.c.b16 %v689, %v688
  %v925 = vpack.c.b16 %v691, %v690
  %v926 = vpack.c.b16 %v693, %v692
  %v927 = vpack.c.b16 %v695, %v694
  %v928 = vpack.c.b16 %v697, %v696
  %v929 = vpack.c.b16 %v699, %v698
  %v930 = vpack.c.b16 %v701, %v700
  %v931 = vpack.c.b16 %v703, %v702
  %v932 = vpack.c.b16 %v705, %v704
  %v933 = vpack.c.b16 %v707, %v706
  %v934 = vpack.c.b16 %v709, %v708
  %v935 = vpack.c.b16 %v711, %v710
  %v936 = vpack.c.b16 %v713, %v712
  %v937 = vpack.c.b16 %v715, %v714
  %v938 = vpack.c.b16 %v717, %v716
  %v939 = vpack.c.b16 %v719, %v718
  %v940 = vpack.c.b16 %v721, %v720
  %v941 = vpack.c.b16 %v723, %v722
  %v942 = vpack.c.b16 %v725, %v724
  %v943 = vpack.c.b16 %v727, %v726
  %v944 = vpack.c.b16 %v729, %v728
  %v945 = vpack.c.b16 %v731, %v730
  %v946 = vpack.c.b16 %v733, %v732
  %v947 = vpack.c.b16 %v735, %v734
  %v948 = vpack.c.b16 %v737, %v736
  %v949 = vpack.c.b16 %v739, %v738
  %v950 = vpack.c.b16 %v741, %v740
  %v951 = vpack.c.b16 %v743, %v742
  %v952 = vpack.c.b16 %v745, %v744
  %v953 = vpack.c.b16 %v747, %v746
  %v954 = vpack.c.b16 %v749, %v748
  %v955 = vpack.c.b16 %v751, %v750
  %v956 = vpack.c.b16 %v753, %v752
  %v957 = vpack.c.b16 %v755, %v754
  %v958 = vpack.c.b16 %v757, %v756
  %v959 = vpack.c.b16 %v759, %v758
  %v960 = vpack.c.b16 %v761, %v760
  %v961 = vpack.c.b16 %v763, %v762
  %v962 = vpack.c.b16 %v765, %v764
  %v963 = vpack.c.b16 %v767, %v766
  %v964 = vpack.c.b16 %v769, %v768
  %v965 = vpack.c.b16 %v771, %v770
  %v966 = vpack.c.b16 %v773, %v772
  %v967 = vpack.c.b16 %v775, %v774
  %v968 = vpack.c.b16 %v777, %v776
  %v969 = vpack.c.b16 %v779, %v778
  %v970 = vpack.c.b16 %v781, %v780
  %v971 = vpack.c.b16 %v783, %v782
  %v972 = vpack.c.b16 %v785, %v784
  %v973 = vpack.c.b16 %v787, %v786
  %v974 = vpack.c.b16 %v789, %v788
  %v975 = vpack.c.b16 %v791, %v790
  %v976 = vpack.c.b16 %v793, %v792
  %v977 = vpack.c.b16 %v795, %v794
  %v978 = vpack.c.b16 %v797, %v796
  %v979 = vpack.c.b16 %v799, %v798
  %v980 = vpack.c.b16 %v801, %v800
  %v981 = vpack.c.b16 %v803, %v802
  %v982 = vpack.c.b16 %v805, %v804
  %v983 = vpack.c.b16 %v807, %v806
  %v984 = vpack.c.b16 %v809, %v808
  %v985 = vpack.c.b16 %v811, %v810
  %v986 = vpack.c.b16 %v813, %v812
  %v987 = vpack.c.b16 %v815, %v814
  %v988 = vpack.c.b16 %v817, %v816
  %v989 = vpack.c.b16 %v819, %v818
  %v990 = vpack.c.b16 %v821, %v820
  %v991 = vpack.c.b16 %v823, %v822
  %v992 = vpack.c.b16 %v825, %v824
  %v993 = vpack.c.b16 %v827, %v826
  %v994 = vpack.c.b16 %v829, %v828
  %v995 = vpack.c.b16 %v831, %v830
  %v996 = vpack.c.b16 %v833, %v832
  %v997 = vpack.c.b16 %v835, %v834
  %v998 = vpack.c.b16 %v837, %v836
  %v999 = vpack.c.b16 %v839, %v838
  %v1000 = vpack.c.b16 %v841, %v840
  %v1001 = vpack.c.b16 %v843, %v842
  %v1002 = vpack.c.b16 %v845, %v844
  %v1003 = vpack.c.b16 %v847, %v846
  %v1004 = vpack.c.b16 %v849, %v848
  %v1005 = vpack.c.b16 %v851, %v850
  %v1006 = vpack.c.b16 %v853, %v852
  %v1007 = vpack.c.b16 %v855, %v854
  %v1008 = vpack.c.b16 %v857, %v856
  %v1009 = vpack.c.b16 %v859, %v858
  %v1010 = vpack.c.b16 %v861, %v860
  %v1011 = vpack.c.b16 %v863, %v862
  %v1012 = vpack.c.b16 %v865, %v864
  %v1013 = vpack.c.b16 %v867, %v866
  %v1014 = vpack.c.b16 %v869, %v868
  %v1015 = vpack.c.b16 %v871, %v870
  %v1016 = vpack.c.b16 %v873, %v872
  %v1017 = vpack.c.b16 %v875, %v874
  %v1018 = vpack.c.b16 %v877, %v876
  %v1019 = vpack.c.b16 %v879, %v878
  %v1020 = vpack.c.b16 %v881, %v880
  %v1021 = vpack.c.b16 %v883, %v882
  %v1022 = vpack.c.b16 %v885, %v884
  %v1023 = vpack.c.b16 %v887, %v886
  %v1024 = vpack.c.b16 %v889, %v888
  %v1025 = vpack.c.b16 %v891, %v890
  %v1026 = vpack.c.b16 %v893, %v892
  %v1027 = vpack.c.b16 %v895, %v894
  %v1028 = vpack.c.b16 %v897, %v896
  %v1029 = vpack.c.b16 %v899, %v898
  %v1030 = vpack.c.b16 %v901, %v900
  %v1031 = vpack.c.b16 %v903, %v902
  %1160 = vmatprep.subr.bf16.mxu0 0
  %1161 = vmatpush1.bf16.msra.mxu0 %v904
  %1162 = vmatprep.subr.bf16.mxu0 0
  %1163 = vmatpush1.bf16.msra.mxu0 %v905
  %1164 = vmatprep.subr.bf16.mxu0 0
  %1165 = vmatpush1.bf16.msra.mxu0 %v906
  %1166 = vmatprep.subr.bf16.mxu0 0
  %1167 = vmatpush1.bf16.msra.mxu0 %v907
  %1168 = vmatprep.subr.bf16.mxu0 0
  %1169 = vmatpush1.bf16.msra.mxu0 %v908
  %1170 = vmatprep.subr.bf16.mxu0 0
  %1171 = vmatpush1.bf16.msra.mxu0 %v909
  %1172 = vmatprep.subr.bf16.mxu0 0
  %1173 = vmatpush1.bf16.msra.mxu0 %v910
  %1174 = vmatprep.subr.bf16.mxu0 0
  %1175 = vmatpush1.bf16.msra.mxu0 %v911
  %1176 = vmatprep.subr.bf16.mxu0 0
  %1177 = vmatpush1.bf16.msra.mxu0 %v912
  %1178 = vmatprep.subr.bf16.mxu0 0
  %1179 = vmatpush1.bf16.msra.mxu0 %v913
  %1180 = vmatprep.subr.bf16.mxu0 0
  %1181 = vmatpush1.bf16.msra.mxu0 %v914
  %1182 = vmatprep.subr.bf16.mxu0 0
  %1183 = vmatpush1.bf16.msra.mxu0 %v915
  %1184 = vmatprep.subr.bf16.mxu0 0
  %1185 = vmatpush1.bf16.msra.mxu0 %v916
  %1186 = vmatprep.subr.bf16.mxu0 0
  %1187 = vmatpush1.bf16.msra.mxu0 %v917
  %1188 = vmatprep.subr.bf16.mxu0 0
  %1189 = vmatpush1.bf16.msra.mxu0 %v918
  %1190 = vmatprep.subr.bf16.mxu0 0
  %1191 = vmatpush1.bf16.msra.mxu0 %v919
  %1192 = vmatprep.mubr.bf16.mxu0 %v114
  %1193 = vmatmul.mubr.bf16.gmra.mrb[0].mxu0 %v113
  %v1194 = vpop.f32.mrb[0].mxu0
  %v1195 = vadd.f32 %v390, %v1194
  %v1196 = vpop.f32.mrb[0].mxu0
  %v1197 = vpop.f32.mrb[0].mxu0
  %v1198 = vpop.f32.mrb[0].mxu0
  %1199 = vdwg.mxu0
  %1200 = vmatprep.subr.bf16.mxu0 0
  %1201 = vmatpush1.bf16.msra.mxu0 %v920
  %1202 = vmatprep.subr.bf16.mxu0 0
  %1203 = vmatpush1.bf16.msra.mxu0 %v921
  %1204 = vmatprep.subr.bf16.mxu0 0
  %1205 = vmatpush1.bf16.msra.mxu0 %v922
  %1206 = vmatprep.subr.bf16.mxu0 0
  %1207 = vmatpush1.bf16.msra.mxu0 %v923
  %1208 = vmatprep.subr.bf16.mxu0 0
  %1209 = vmatpush1.bf16.msra.mxu0 %v924
  %1210 = vmatprep.subr.bf16.mxu0 0
  %1211 = vmatpush1.bf16.msra.mxu0 %v925
  %1212 = vmatprep.subr.bf16.mxu0 0
  %1213 = vmatpush1.bf16.msra.mxu0 %v926
  %1214 = vmatprep.subr.bf16.mxu0 0
  %1215 = vmatpush1.bf16.msra.mxu0 %v927
  %1216 = vmatprep.subr.bf16.mxu0 0
  %1217 = vmatpush1.bf16.msra.mxu0 %v928
  %1218 = vmatprep.subr.bf16.mxu0 0
  %1219 = vmatpush1.bf16.msra.mxu0 %v929
  %1220 = vmatprep.subr.bf16.mxu0 0
  %1221 = vmatpush1.bf16.msra.mxu0 %v930
  %1222 = vmatprep.subr.bf16.mxu0 0
  %1223 = vmatpush1.bf16.msra.mxu0 %v931
  %1224 = vmatprep.subr.bf16.mxu0 0
  %1225 = vmatpush1.bf16.msra.mxu0 %v932
  %1226 = vmatprep.subr.bf16.mxu0 0
  %1227 = vmatpush1.bf16.msra.mxu0 %v933
  %1228 = vmatprep.subr.bf16.mxu0 0
  %1229 = vmatpush1.bf16.msra.mxu0 %v934
  %1230 = vmatprep.subr.bf16.mxu0 0
  %1231 = vmatpush1.bf16.msra.mxu0 %v935
  %1232 = vmatprep.mubr.bf16.mxu0 %v116
  %1233 = vmatmul.mubr.bf16.gmra.mrb[0].mxu0 %v115
  %v1234 = vpop.f32.mrb[0].mxu0
  %v1235 = vadd.f32 %v1195, %v1234
  %v1236 = vpop.f32.mrb[0].mxu0
  %v1237 = vpop.f32.mrb[0].mxu0
  %v1238 = vpop.f32.mrb[0].mxu0
  %1239 = vdwg.mxu0
  %1240 = vmatprep.subr.bf16.mxu0 0
  %1241 = vmatpush1.bf16.msra.mxu0 %v936
  %1242 = vmatprep.subr.bf16.mxu0 0
  %1243 = vmatpush1.bf16.msra.mxu0 %v937
  %1244 = vmatprep.subr.bf16.mxu0 0
  %1245 = vmatpush1.bf16.msra.mxu0 %v938
  %1246 = vmatprep.subr.bf16.mxu0 0
  %1247 = vmatpush1.bf16.msra.mxu0 %v939
  %1248 = vmatprep.subr.bf16.mxu0 0
  %1249 = vmatpush1.bf16.msra.mxu0 %v940
  %1250 = vmatprep.subr.bf16.mxu0 0
  %1251 = vmatpush1.bf16.msra.mxu0 %v941
  %1252 = vmatprep.subr.bf16.mxu0 0
  %1253 = vmatpush1.bf16.msra.mxu0 %v942
  %1254 = vmatprep.subr.bf16.mxu0 0
  %1255 = vmatpush1.bf16.msra.mxu0 %v943
  %1256 = vmatprep.subr.bf16.mxu0 0
  %1257 = vmatpush1.bf16.msra.mxu0 %v944
  %1258 = vmatprep.subr.bf16.mxu0 0
  %1259 = vmatpush1.bf16.msra.mxu0 %v945
  %1260 = vmatprep.subr.bf16.mxu0 0
  %1261 = vmatpush1.bf16.msra.mxu0 %v946
  %1262 = vmatprep.subr.bf16.mxu0 0
  %1263 = vmatpush1.bf16.msra.mxu0 %v947
  %1264 = vmatprep.subr.bf16.mxu0 0
  %1265 = vmatpush1.bf16.msra.mxu0 %v948
  %1266 = vmatprep.subr.bf16.mxu0 0
  %1267 = vmatpush1.bf16.msra.mxu0 %v949
  %1268 = vmatprep.subr.bf16.mxu0 0
  %1269 = vmatpush1.bf16.msra.mxu0 %v950
  %1270 = vmatprep.subr.bf16.mxu0 0
  %1271 = vmatpush1.bf16.msra.mxu0 %v951
  %1272 = vmatprep.mubr.bf16.mxu0 %v118
  %1273 = vmatmul.mubr.bf16.gmra.mrb[0].mxu0 %v117
  %v1274 = vpop.f32.mrb[0].mxu0
  %v1275 = vadd.f32 %v1235, %v1274
  %v1276 = vpop.f32.mrb[0].mxu0
  %v1277 = vpop.f32.mrb[0].mxu0
  %v1278 = vpop.f32.mrb[0].mxu0
  %1279 = vdwg.mxu0
  %1280 = vmatprep.subr.bf16.mxu0 0
  %1281 = vmatpush1.bf16.msra.mxu0 %v952
  %1282 = vmatprep.subr.bf16.mxu0 0
  %1283 = vmatpush1.bf16.msra.mxu0 %v953
  %1284 = vmatprep.subr.bf16.mxu0 0
  %1285 = vmatpush1.bf16.msra.mxu0 %v954
  %1286 = vmatprep.subr.bf16.mxu0 0
  %1287 = vmatpush1.bf16.msra.mxu0 %v955
  %1288 = vmatprep.subr.bf16.mxu0 0
  %1289 = vmatpush1.bf16.msra.mxu0 %v956
  %1290 = vmatprep.subr.bf16.mxu0 0
  %1291 = vmatpush1.bf16.msra.mxu0 %v957
  %1292 = vmatprep.subr.bf16.mxu0 0
  %1293 = vmatpush1.bf16.msra.mxu0 %v958
  %1294 = vmatprep.subr.bf16.mxu0 0
  %1295 = vmatpush1.bf16.msra.mxu0 %v959
  %1296 = vmatprep.subr.bf16.mxu0 0
  %1297 = vmatpush1.bf16.msra.mxu0 %v960
  %1298 = vmatprep.subr.bf16.mxu0 0
  %1299 = vmatpush1.bf16.msra.mxu0 %v961
  %1300 = vmatprep.subr.bf16.mxu0 0
  %1301 = vmatpush1.bf16.msra.mxu0 %v962
  %1302 = vmatprep.subr.bf16.mxu0 0
  %1303 = vmatpush1.bf16.msra.mxu0 %v963
  %1304 = vmatprep.subr.bf16.mxu0 0
  %1305 = vmatpush1.bf16.msra.mxu0 %v964
  %1306 = vmatprep.subr.bf16.mxu0 0
  %1307 = vmatpush1.bf16.msra.mxu0 %v965
  %1308 = vmatprep.subr.bf16.mxu0 0
  %1309 = vmatpush1.bf16.msra.mxu0 %v966
  %1310 = vmatprep.subr.bf16.mxu0 0
  %1311 = vmatpush1.bf16.msra.mxu0 %v967
  %1312 = vmatprep.mubr.bf16.mxu0 %v120
  %1313 = vmatmul.mubr.bf16.gmra.mrb[0].mxu0 %v119
  %v1314 = vpop.f32.mrb[0].mxu0
  %v1315 = vadd.f32 %v1275, %v1314
  %v1316 = vpop.f32.mrb[0].mxu0
  %v1317 = vpop.f32.mrb[0].mxu0
  %v1318 = vpop.f32.mrb[0].mxu0
  %1319 = vdwg.mxu0
  %1320 = vmatprep.subr.bf16.mxu0 0
  %1321 = vmatpush1.bf16.msra.mxu0 %v968
  %1322 = vmatprep.subr.bf16.mxu0 0
  %1323 = vmatpush1.bf16.msra.mxu0 %v969
  %1324 = vmatprep.subr.bf16.mxu0 0
  %1325 = vmatpush1.bf16.msra.mxu0 %v970
  %1326 = vmatprep.subr.bf16.mxu0 0
  %1327 = vmatpush1.bf16.msra.mxu0 %v971
  %1328 = vmatprep.subr.bf16.mxu0 0
  %1329 = vmatpush1.bf16.msra.mxu0 %v972
  %1330 = vmatprep.subr.bf16.mxu0 0
  %1331 = vmatpush1.bf16.msra.mxu0 %v973
  %1332 = vmatprep.subr.bf16.mxu0 0
  %1333 = vmatpush1.bf16.msra.mxu0 %v974
  %1334 = vmatprep.subr.bf16.mxu0 0
  %1335 = vmatpush1.bf16.msra.mxu0 %v975
  %1336 = vmatprep.subr.bf16.mxu0 0
  %1337 = vmatpush1.bf16.msra.mxu0 %v976
  %1338 = vmatprep.subr.bf16.mxu0 0
  %1339 = vmatpush1.bf16.msra.mxu0 %v977
  %1340 = vmatprep.subr.bf16.mxu0 0
  %1341 = vmatpush1.bf16.msra.mxu0 %v978
  %1342 = vmatprep.subr.bf16.mxu0 0
  %1343 = vmatpush1.bf16.msra.mxu0 %v979
  %1344 = vmatprep.subr.bf16.mxu0 0
  %1345 = vmatpush1.bf16.msra.mxu0 %v980
  %1346 = vmatprep.subr.bf16.mxu0 0
  %1347 = vmatpush1.bf16.msra.mxu0 %v981
  %1348 = vmatprep.subr.bf16.mxu0 0
  %1349 = vmatpush1.bf16.msra.mxu0 %v982
  %1350 = vmatprep.subr.bf16.mxu0 0
  %1351 = vmatpush1.bf16.msra.mxu0 %v983
  %1352 = vmatprep.mubr.bf16.mxu0 %v122
  %1353 = vmatmul.mubr.bf16.gmra.mrb[0].mxu0 %v121
  %v1354 = vpop.f32.mrb[0].mxu0
  %v1355 = vadd.f32 %v1315, %v1354
  %v1356 = vpop.f32.mrb[0].mxu0
  %v1357 = vpop.f32.mrb[0].mxu0
  %v1358 = vpop.f32.mrb[0].mxu0
  %1359 = vdwg.mxu0
  %1360 = vmatprep.subr.bf16.mxu0 0
  %1361 = vmatpush1.bf16.msra.mxu0 %v984
  %1362 = vmatprep.subr.bf16.mxu0 0
  %1363 = vmatpush1.bf16.msra.mxu0 %v985
  %1364 = vmatprep.subr.bf16.mxu0 0
  %1365 = vmatpush1.bf16.msra.mxu0 %v986
  %1366 = vmatprep.subr.bf16.mxu0 0
  %1367 = vmatpush1.bf16.msra.mxu0 %v987
  %1368 = vmatprep.subr.bf16.mxu0 0
  %1369 = vmatpush1.bf16.msra.mxu0 %v988
  %1370 = vmatprep.subr.bf16.mxu0 0
  %1371 = vmatpush1.bf16.msra.mxu0 %v989
  %1372 = vmatprep.subr.bf16.mxu0 0
  %1373 = vmatpush1.bf16.msra.mxu0 %v990
  %1374 = vmatprep.subr.bf16.mxu0 0
  %1375 = vmatpush1.bf16.msra.mxu0 %v991
  %1376 = vmatprep.subr.bf16.mxu0 0
  %1377 = vmatpush1.bf16.msra.mxu0 %v992
  %1378 = vmatprep.subr.bf16.mxu0 0
  %1379 = vmatpush1.bf16.msra.mxu0 %v993
  %1380 = vmatprep.subr.bf16.mxu0 0
  %1381 = vmatpush1.bf16.msra.mxu0 %v994
  %1382 = vmatprep.subr.bf16.mxu0 0
  %1383 = vmatpush1.bf16.msra.mxu0 %v995
  %1384 = vmatprep.subr.bf16.mxu0 0
  %1385 = vmatpush1.bf16.msra.mxu0 %v996
  %1386 = vmatprep.subr.bf16.mxu0 0
  %1387 = vmatpush1.bf16.msra.mxu0 %v997
  %1388 = vmatprep.subr.bf16.mxu0 0
  %1389 = vmatpush1.bf16.msra.mxu0 %v998
  %1390 = vmatprep.subr.bf16.mxu0 0
  %1391 = vmatpush1.bf16.msra.mxu0 %v999
  %1392 = vmatprep.mubr.bf16.mxu0 %v124
  %1393 = vmatmul.mubr.bf16.gmra.mrb[0].mxu0 %v123
  %v1394 = vpop.f32.mrb[0].mxu0
  %v1395 = vadd.f32 %v1355, %v1394
  %v1396 = vpop.f32.mrb[0].mxu0
  %v1397 = vpop.f32.mrb[0].mxu0
  %v1398 = vpop.f32.mrb[0].mxu0
  %1399 = vdwg.mxu0
  %1400 = vmatprep.subr.bf16.mxu0 0
  %1401 = vmatpush1.bf16.msra.mxu0 %v1000
  %1402 = vmatprep.subr.bf16.mxu0 0
  %1403 = vmatpush1.bf16.msra.mxu0 %v1001
  %1404 = vmatprep.subr.bf16.mxu0 0
  %1405 = vmatpush1.bf16.msra.mxu0 %v1002
  %1406 = vmatprep.subr.bf16.mxu0 0
  %1407 = vmatpush1.bf16.msra.mxu0 %v1003
  %1408 = vmatprep.subr.bf16.mxu0 0
  %1409 = vmatpush1.bf16.msra.mxu0 %v1004
  %1410 = vmatprep.subr.bf16.mxu0 0
  %1411 = vmatpush1.bf16.msra.mxu0 %v1005
  %1412 = vmatprep.subr.bf16.mxu0 0
  %1413 = vmatpush1.bf16.msra.mxu0 %v1006
  %1414 = vmatprep.subr.bf16.mxu0 0
  %1415 = vmatpush1.bf16.msra.mxu0 %v1007
  %1416 = vmatprep.subr.bf16.mxu0 0
  %1417 = vmatpush1.bf16.msra.mxu0 %v1008
  %1418 = vmatprep.subr.bf16.mxu0 0
  %1419 = vmatpush1.bf16.msra.mxu0 %v1009
  %1420 = vmatprep.subr.bf16.mxu0 0
  %1421 = vmatpush1.bf16.msra.mxu0 %v1010
  %1422 = vmatprep.subr.bf16.mxu0 0
  %1423 = vmatpush1.bf16.msra.mxu0 %v1011
  %1424 = vmatprep.subr.bf16.mxu0 0
  %1425 = vmatpush1.bf16.msra.mxu0 %v1012
  %1426 = vmatprep.subr.bf16.mxu0 0
  %1427 = vmatpush1.bf16.msra.mxu0 %v1013
  %1428 = vmatprep.subr.bf16.mxu0 0
  %1429 = vmatpush1.bf16.msra.mxu0 %v1014
  %1430 = vmatprep.subr.bf16.mxu0 0
  %1431 = vmatpush1.bf16.msra.mxu0 %v1015
  %1432 = vmatprep.mubr.bf16.mxu0 %v126
  %1433 = vmatmul.mubr.bf16.gmra.mrb[0].mxu0 %v125
  %v1434 = vpop.f32.mrb[0].mxu0
  %v1435 = vadd.f32 %v1395, %v1434
  %v1436 = vpop.f32.mrb[0].mxu0
  %v1437 = vpop.f32.mrb[0].mxu0
  %v1438 = vpop.f32.mrb[0].mxu0
  %1439 = vdwg.mxu0
  %1440 = vmatprep.subr.bf16.mxu0 0
  %1441 = vmatpush1.bf16.msra.mxu0 %v1016
  %1442 = vmatprep.subr.bf16.mxu0 0
  %1443 = vmatpush1.bf16.msra.mxu0 %v1017
  %1444 = vmatprep.subr.bf16.mxu0 0
  %1445 = vmatpush1.bf16.msra.mxu0 %v1018
  %1446 = vmatprep.subr.bf16.mxu0 0
  %1447 = vmatpush1.bf16.msra.mxu0 %v1019
  %1448 = vmatprep.subr.bf16.mxu0 0
  %1449 = vmatpush1.bf16.msra.mxu0 %v1020
  %1450 = vmatprep.subr.bf16.mxu0 0
  %1451 = vmatpush1.bf16.msra.mxu0 %v1021
  %1452 = vmatprep.subr.bf16.mxu0 0
  %1453 = vmatpush1.bf16.msra.mxu0 %v1022
  %1454 = vmatprep.subr.bf16.mxu0 0
  %1455 = vmatpush1.bf16.msra.mxu0 %v1023
  %1456 = vmatprep.subr.bf16.mxu0 0
  %1457 = vmatpush1.bf16.msra.mxu0 %v1024
  %1458 = vmatprep.subr.bf16.mxu0 0
  %1459 = vmatpush1.bf16.msra.mxu0 %v1025
  %1460 = vmatprep.subr.bf16.mxu0 0
  %1461 = vmatpush1.bf16.msra.mxu0 %v1026
  %1462 = vmatprep.subr.bf16.mxu0 0
  %1463 = vmatpush1.bf16.msra.mxu0 %v1027
  %1464 = vmatprep.subr.bf16.mxu0 0
  %1465 = vmatpush1.bf16.msra.mxu0 %v1028
  %1466 = vmatprep.subr.bf16.mxu0 0
  %1467 = vmatpush1.bf16.msra.mxu0 %v1029
  %1468 = vmatprep.subr.bf16.mxu0 0
  %1469 = vmatpush1.bf16.msra.mxu0 %v1030
  %1470 = vmatprep.subr.bf16.mxu0 0
  %1471 = vmatpush1.bf16.msra.mxu0 %v1031
  %1472 = vmatprep.mubr.bf16.mxu0 %v128
  %1473 = vmatmul.mubr.bf16.gmra.mrb[0].mxu0 %v127
  %v1474 = vpop.f32.mrb[0].mxu0
  %v1475 = vadd.f32 %v1435, %v1474
  %v1476 = vpop.f32.mrb[0].mxu0
  %v1477 = vpop.f32.mrb[0].mxu0
  %v1478 = vpop.f32.mrb[0].mxu0
  %1479 = vdwg.mxu0
  %v1480 = vld [vmem:[%s3] sm:$0xff]
  %v1481 = vld [vmem:[%s3 + $0x8] sm:$0xff]
  %v1482 = vld [vmem:[%s3 + $0x10] sm:$0xff]
  %v1483 = vld [vmem:[%s3 + $0x18] sm:$0xff]
  %v1484 = vld [vmem:[%s3 + $0x20] sm:$0xff]
  %v1485 = vld [vmem:[%s3 + $0x28] sm:$0xff]
  %v1486 = vld [vmem:[%s3 + $0x30] sm:$0xff]
  %v1487 = vld [vmem:[%s3 + $0x38] sm:$0xff]
  %v1488 = vld [vmem:[%s3 + $0x40] sm:$0xff]
  %v1489 = vld [vmem:[%s3 + $0x48] sm:$0xff]
  %v1490 = vld [vmem:[%s3 + $0x50] sm:$0xff]
  %v1491 = vld [vmem:[%s3 + $0x58] sm:$0xff]
  %v1492 = vld [vmem:[%s3 + $0x60] sm:$0xff]
  %v1493 = vld [vmem:[%s3 + $0x68] sm:$0xff]
  %v1494 = vld [vmem:[%s3 + $0x70] sm:$0xff]
  %v1495 = vld [vmem:[%s3 + $0x78] sm:$0xff]
  %v1496 = vld [vmem:[%s4] sm:$0x1]
  %v1498 = vlaneseq
  %v1499 = vshrl.u32 %v1498, 7
  %v1500 = vsub.s32 0, %v1499
  %v1501 = vrot.slane %v1496, %v1500
  %1503 = vmatprep.subr.mxu0 0.0
  %1504 = vmatpush1.msra.mxu0 %v1480
  %1505 = vmatprep.subr.mxu0 0.0
  %1506 = vmatpush1.msra.mxu0 %v1481
  %1507 = vmatprep.subr.mxu0 0.0
  %1508 = vmatpush1.msra.mxu0 %v1482
  %1509 = vmatprep.subr.mxu0 0.0
  %1510 = vmatpush1.msra.mxu0 %v1483
  %1511 = vmatprep.subr.mxu0 0.0
  %1512 = vmatpush1.msra.mxu0 %v1484
  %1513 = vmatprep.subr.mxu0 0.0
  %1514 = vmatpush1.msra.mxu0 %v1485
  %1515 = vmatprep.subr.mxu0 0.0
  %1516 = vmatpush1.msra.mxu0 %v1486
  %1517 = vmatprep.subr.mxu0 0.0
  %1518 = vmatpush1.msra.mxu0 %v1487
  %1519 = vmatprep.subr.mxu0 0.0
  %1520 = vmatpush1.msra.mxu0 %v1488
  %1521 = vmatprep.subr.mxu0 0.0
  %1522 = vmatpush1.msra.mxu0 %v1489
  %1523 = vmatprep.subr.mxu0 0.0
  %1524 = vmatpush1.msra.mxu0 %v1490
  %1525 = vmatprep.subr.mxu0 0.0
  %1526 = vmatpush1.msra.mxu0 %v1491
  %1527 = vmatprep.subr.mxu0 0.0
  %1528 = vmatpush1.msra.mxu0 %v1492
  %1529 = vmatprep.subr.mxu0 0.0
  %1530 = vmatpush1.msra.mxu0 %v1493
  %1531 = vmatprep.subr.mxu0 0.0
  %1532 = vmatpush1.msra.mxu0 %v1494
  %1533 = vmatprep.subr.mxu0 0.0
  %1534 = vmatpush1.msra.mxu0 %v1495
  %1535 = vmatprep.subr.mxu0 0.0
  %1536 = vmatpush1.msra.mxu0 0.0
  %1537 = vmatprep.subr.mxu0 0.0
  %1538 = vmatpush1.msra.mxu0 0.0
  %1539 = vmatprep.subr.mxu0 0.0
  %1540 = vmatpush1.msra.mxu0 0.0
  %1541 = vmatprep.subr.mxu0 0.0
  %1542 = vmatpush1.msra.mxu0 0.0
  %1543 = vmatprep.subr.mxu0 0.0
  %1544 = vmatpush1.msra.mxu0 0.0
  %1545 = vmatprep.subr.mxu0 0.0
  %1546 = vmatpush1.msra.mxu0 0.0
  %1547 = vmatprep.subr.mxu0 0.0
  %1548 = vmatpush1.msra.mxu0 0.0
  %1549 = vmatprep.subr.mxu0 0.0
  %1550 = vmatpush1.msra.mxu0 0.0
  %1551 = vmatprep.subr.mxu0 0.0
  %1552 = vmatpush1.msra.mxu0 0.0
  %1553 = vmatprep.subr.mxu0 0.0
  %1554 = vmatpush1.msra.mxu0 0.0
  %1555 = vmatprep.subr.mxu0 0.0
  %1556 = vmatpush1.msra.mxu0 0.0
  %1557 = vmatprep.subr.mxu0 0.0
  %1558 = vmatpush1.msra.mxu0 0.0
  %1559 = vmatprep.subr.mxu0 0.0
  %1560 = vmatpush1.msra.mxu0 0.0
  %1561 = vmatprep.subr.mxu0 0.0
  %1562 = vmatpush1.msra.mxu0 0.0
  %1563 = vmatprep.subr.mxu0 0.0
  %1564 = vmatpush1.msra.mxu0 0.0
  %1565 = vmatprep.subr.mxu0 0.0
  %1566 = vmatpush1.msra.mxu0 0.0
  %1567 = vmatprep.mubr.f32.mxu0 0.0
  %1568 = vmatmul.mubr.f32.gmra.mrb[0].mxu0 %v1475
  %v1569 = vpop.f32.mrb[0].mxu0
  %v1570 = vadd.f32 %v1501, %v1569
  %v1571 = vpop.f32.mrb[0].mxu0
  %1572 = vdwg.mxu0
  %1573 = vst [vmem:[%s5] sm:$0x3] %v1570
  // Predicated region
  $region22: #{cnn_forward.3} parent=0 // pred_check
    _
  $region23: #{cnn_forward.3} parent=0 // pred_check_branch
    %1575 = sbr.rel (0) target = $region25
  $region24: #{cnn_forward.3} parent=0 // pred_region
    _
  $region25: #{cnn_forward.3} parent=0 // pred_fallthru
    _
  // Predicated region
  $region26: #{cnn_forward.3} parent=0 // pred_check
    _
  $region27: #{cnn_forward.3} parent=0 // pred_check_branch
    %1577 = sbr.rel (0) target = $region29
  $region28: #{cnn_forward.3} parent=0 // pred_region
    _
  $region29: #{cnn_forward.3} parent=0 // pred_fallthru
    _

</llo_original>
